<compile_context>
chip_gen: v5e
topology: v5e:2x2
jax: 0.10.0
libtpu: 0.0.40
codegen_flags: <defaults>
</compile_context>

<pallas_src>
import functools

import jax
import jax.numpy as jnp
from jax import lax
from jax.experimental import pallas as pl
from jax.experimental.pallas import tpu as pltpu


def _pick_out_tile(N):
    """Output-pixel tile (lane axis). Always a multiple of 128."""
    for t in (512, 384, 256, 128):
        if N % t == 0:
            return t
    return min(512, ((N + 127) // 128) * 128)


def _pick_rows(C, h):
    """Rows per contraction chunk: divisor of h, multiple of 8 when possible,
    targeting an MXU M-dim (C*R) of roughly 256."""
    target = max(8, min(h, -(-256 // C)))
    divs8 = [r for r in range(8, h + 1, 8) if h % r == 0]
    if not divs8:
        return h                       # no 8-aligned divisor: single full-height chunk
    under = [r for r in divs8 if r <= target]
    return max(under) if under else min(divs8)


def _view_synth_kernel(H, W, R, nk, TN,
                       depth_ref, cams_ref, img_ref,
                       warp_ref, dwarp_ref, mask_ref):
    f32 = jnp.float32
    bf16 = jnp.bfloat16
    bi = pl.program_id(0)
    tj = pl.program_id(1)
    C = warp_ref.shape[1]

    # ---- camera matrices: 48 SMEM scalars -> unrolled scalar FMAs (no MXU work) ----
    Tm = [cams_ref[bi, k] for k in range(16)]
    Km = [cams_ref[bi, 16 + k] for k in range(16)]
    KI = [cams_ref[bi, 32 + k] for k in range(16)]

    # ---- output-pixel coords generated in-kernel (no pix input / extra DMA stream) --
    lane = lax.broadcasted_iota(jnp.int32, (1, TN), 1).astype(f32)
    n_f = lane + (tj * TN).astype(f32)                  # flat output index (exact < 2^23)
    py = jnp.floor(n_f * (1.0 / W))
    px = n_f - py * float(W)
    # exact-integer fix-up in case the f32 multiply-by-reciprocal rounds across a bin
    lo = px < 0.0
    py = jnp.where(lo, py - 1.0, py)
    px = jnp.where(lo, px + float(W), px)
    hi = px >= float(W)
    py = jnp.where(hi, py + 1.0, py)
    px = jnp.where(hi, px - float(W), px)

    d = depth_ref[0]                                    # (1, TN)

    # --- BackprojectDepth: cam = K_inv[:3,:3] @ [x; y; 1]; pts = cam * depth
    cam0 = KI[0] * px + KI[1] * py + KI[2]
    cam1 = KI[4] * px + KI[5] * py + KI[6]
    cam2 = KI[8] * px + KI[9] * py + KI[10]
    X0 = cam0 * d
    X1 = cam1 * d
    X2 = cam2 * d

    # --- ProjectPoints: tp = T @ [X; 1]   (rows 0..2 only)
    tp0 = Tm[0] * X0 + Tm[1] * X1 + Tm[2] * X2 + Tm[3]
    tp1 = Tm[4] * X0 + Tm[5] * X1 + Tm[6] * X2 + Tm[7]
    tp2 = Tm[8] * X0 + Tm[9] * X1 + Tm[10] * X2 + Tm[11]

    eps = float(jnp.finfo(jnp.float32).eps)
    depth_w = jnp.maximum(tp2, eps)
    dwarp_ref[0] = depth_w

    # EUP reciprocal (+1 Newton step); avoids VPU divides on the projection path.
    dc = jnp.maximum(depth_w, 0.1)
    rcp = pl.reciprocal(dc, approx=True)
    inv_d = rcp * (2.0 - dc * rcp)
    s0 = tp0 * inv_d
    s1 = tp1 * inv_d
    s2 = tp2 * inv_d
    proj0 = Km[0] * s0 + Km[1] * s1 + Km[2] * s2
    proj1 = Km[4] * s0 + Km[5] * s1 + Km[6] * s2

    # grid normalization with folded constants
    gx = proj0 * (2.0 / (W - 1)) - 1.0
    gy = proj1 * (2.0 / (H - 1)) - 1.0
    mask_ref[0] = ((jnp.abs(gx) < 1.0) & (jnp.abs(gy) < 1.0)).astype(f32)

    # --- grid_sample: bilinear / padding_mode='border' / align_corners=False
    ix = jnp.clip(gx * (0.5 * W) + (0.5 * W - 0.5), 0.0, W - 1.0)
    iy = jnp.clip(gy * (0.5 * H) + (0.5 * H - 0.5), 0.0, H - 1.0)
    x0 = jnp.floor(ix)
    y0 = jnp.floor(iy)
    fx = ix - x0
    fy = iy - y0
    x1 = jnp.minimum(x0 + 1.0, W - 1.0)
    y1 = jnp.minimum(y0 + 1.0, H - 1.0)
    wx0 = 1.0 - fx
    wy0 = 1.0 - fy

    # ---- separable bilinear contraction -------------------------------------------
    # Stage-1 column-weight matrix WX (W, TN) is k-invariant -> built once per tile.
    col = lax.broadcasted_iota(jnp.int32, (W, 1), 0).astype(f32)
    WX = (jnp.where(col == x0, wx0, 0.0)
          + jnp.where(col == x1, fx, 0.0)).astype(bf16)           # (W, TN) bf16

    row_l = lax.broadcasted_iota(jnp.int32, (R, 1), 0).astype(f32)  # local row ids

    def body(k, acc):
        # chunk selected along a leading axis: no lane-dim dynamic slice.
        chunk = img_ref[0, k]                                       # (C*R, W) bf16
        Gk = jnp.dot(chunk, WX, preferred_element_type=f32)         # (C*R, TN) f32 (MXU)
        rowk = row_l + (k * R).astype(f32)                          # (R, 1)
        WYk = (jnp.where(rowk == y0, wy0, 0.0)
               + jnp.where(rowk == y1, fy, 0.0))                    # (R, TN) f32
        # stage 2: per-channel row-weighted reduce on the VPU, f32 accumulation.
        return tuple(
            acc[c] + jnp.sum(Gk[c * R:(c + 1) * R, :] * WYk, axis=0, keepdims=True)
            for c in range(C))

    acc0 = tuple(jnp.zeros((1, TN), f32) for _ in range(C))
    acc = lax.fori_loop(0, nk, body, acc0, unroll=(nk <= 4))

    for c in range(C):
        warp_ref[0, c:c + 1, :] = acc[c].astype(warp_ref.dtype)


def view_synth(inp, depth, T, K, K_inv=None):
    """Pallas ViewSynth forward. inp: (b,C,h,w), depth: (b,1,h,w), T/K: (b,4,4)."""
    b, C, h, w = inp.shape
    N = h * w
    assert N < (1 << 23), "flat pixel index must stay exactly representable in f32"
    if K_inv is None:
        # TODO(synk): 4x4 matrix inverse stays in plain JAX (no useful Pallas form).
        K_inv = jnp.linalg.inv(K)

    TN = _pick_out_tile(N)
    N_pad = ((N + TN - 1) // TN) * TN
    n_tiles = N_pad // TN
    R = _pick_rows(C, h)
    nk = h // R
    assert nk * R == h

    # chunk-major image layout (b, nk, C*R, w): row chunk k is a leading-axis slab,
    # rows ordered channel-major / row-minor -> Gk row index = c*R + r.
    img_r = (inp.reshape(b, C, nk, R, w)
                .transpose(0, 2, 1, 3, 4)
                .reshape(b, nk, C * R, w)
                .astype(jnp.bfloat16))

    depth_flat = depth.reshape(b, 1, N).astype(jnp.float32)
    if N_pad != N:
        depth_flat = jnp.pad(depth_flat, ((0, 0), (0, 0), (0, N_pad - N)),
                             constant_values=1.0)

    # merged camera parameters: [T(16) | K(16) | K_inv(16)] per batch, in SMEM.
    cams = jnp.concatenate([T.reshape(b, 16), K.reshape(b, 16),
                            K_inv.reshape(b, 16)], axis=1).astype(jnp.float32)

    kernel = functools.partial(_view_synth_kernel, h, w, R, nk, TN)
    out_shapes = (
        jax.ShapeDtypeStruct((b, C, N_pad), jnp.float32),   # warped input
        jax.ShapeDtypeStruct((b, 1, N_pad), jnp.float32),   # warped depth
        jax.ShapeDtypeStruct((b, 1, N_pad), jnp.float32),   # validity mask (as f32)
    )
    warp, dwarp, mask = pl.pallas_call(
        kernel,
        out_shape=out_shapes,
        grid=(b, n_tiles),
        in_specs=[
            pl.BlockSpec((1, 1, TN), lambda i, j: (i, 0, j)),
            pl.BlockSpec(memory_space=pltpu.MemorySpace.SMEM),
            pl.BlockSpec((1, nk, C * R, w), lambda i, j: (i, 0, 0, 0)),
        ],
        out_specs=(
            pl.BlockSpec((1, C, TN), lambda i, j: (i, 0, j)),
            pl.BlockSpec((1, 1, TN), lambda i, j: (i, 0, j)),
            pl.BlockSpec((1, 1, TN), lambda i, j: (i, 0, j)),
        ),
        compiler_params=pltpu.CompilerParams(
            dimension_semantics=("parallel", "parallel"),
            vmem_limit_bytes=40 * 1024 * 1024),
    )(depth_flat, cams, img_r)

    input_warp = warp[:, :, :N].reshape(b, C, h, w).astype(inp.dtype)
    depth_warp = dwarp[:, :, :N].reshape(b, 1, h, w)
    mask_valid = (mask[:, :, :N] > 0.5).reshape(b, 1, h, w)
    return input_warp, depth_warp, mask_valid


def _reference(inp, depth, T, K, K_inv):
    """Pure-JAX reference (gather-based grid_sample) for sanity checking."""
    b, C, h, w = inp.shape
    N = h * w
    xs = jnp.arange(w, dtype=jnp.float32)
    ys = jnp.arange(h, dtype=jnp.float32)
    X, Y = jnp.meshgrid(xs, ys, indexing='xy')
    pix = jnp.stack([X.reshape(-1), Y.reshape(-1), jnp.ones((N,))], 0)  # (3, N)

    def one(img, d, Tb, Kb, Kib):
        cam = Kib[:3, :3] @ pix
        pts = cam * d.reshape(1, N)
        pts4 = jnp.concatenate([pts, jnp.ones((1, N))], 0)
        tp = (Tb @ pts4)[:3]
        z = jnp.maximum(tp[2:3], jnp.finfo(jnp.float32).eps)
        proj = (Kb[:3, :3] @ (tp / jnp.maximum(z, 0.1)))[:2]
        gx = (proj[0] / (w - 1) - 0.5) * 2.0
        gy = (proj[1] / (h - 1) - 0.5) * 2.0
        mask = (jnp.abs(gx) < 1) & (jnp.abs(gy) < 1)
        ix = jnp.clip(((gx + 1) * w - 1) / 2, 0, w - 1)
        iy = jnp.clip(((gy + 1) * h - 1) / 2, 0, h - 1)
        x0 = jnp.floor(ix); y0 = jnp.floor(iy)
        fx = ix - x0; fy = iy - y0
        x0i = x0.astype(jnp.int32); y0i = y0.astype(jnp.int32)
        x1i = jnp.minimum(x0i + 1, w - 1); y1i = jnp.minimum(y0i + 1, h - 1)
        imgf = img.reshape(C, N)

        def g(yi, xi):
            return imgf[:, yi * w + xi]

        out = (g(y0i, x0i) * ((1 - fx) * (1 - fy)) + g(y0i, x1i) * (fx * (1 - fy))
               + g(y1i, x0i) * ((1 - fx) * fy) + g(y1i, x1i) * (fx * fy))
        return out.reshape(C, h, w), z.reshape(1, h, w), mask.reshape(1, h, w)

    return jax.vmap(one)(inp, depth, T, K, K_inv)


def _run_case(b, C, h, w, key):
    k1, k2, k3 = jax.random.split(key, 3)
    inp = jax.random.normal(k1, (b, C, h, w), jnp.float32)
    depth = 1.0 + 4.0 * jax.random.uniform(k2, (b, 1, h, w), jnp.float32)
    K = jnp.tile(jnp.array([[float(w), 0., (w - 1) / 2., 0.],
                            [0., float(h), (h - 1) / 2., 0.],
                            [0., 0., 1., 0.],
                            [0., 0., 0., 1.]], jnp.float32)[None], (b, 1, 1))
    t = 0.1 * jax.random.normal(k3, (b, 3), jnp.float32)
    T = jnp.tile(jnp.eye(4, dtype=jnp.float32)[None], (b, 1, 1))
    T = T.at[:, :3, 3].set(t)
    K_inv = jnp.linalg.inv(K)

    input_warp, depth_warp, mask_valid = view_synth(inp, depth, T, K, K_inv)
    jax.block_until_ready((input_warp, depth_warp, mask_valid))

    # Sanity check against the pure-JAX f32 reference; the kernel feeds the MXU with
    # bf16 operands (image, WX), so the image-warp tolerance is set accordingly.
    ref_warp, ref_depth, ref_mask = _reference(inp, depth, T, K, K_inv)
    assert input_warp.shape == (b, C, h, w)
    assert depth_warp.shape == (b, 1, h, w)
    assert mask_valid.shape == (b, 1, h, w) and mask_valid.dtype == jnp.bool_
    assert jnp.allclose(input_warp, ref_warp, atol=3e-2, rtol=3e-2)
    assert jnp.allclose(depth_warp, ref_depth, atol=1e-3, rtol=1e-3)
    assert float(jnp.mean((mask_valid == ref_mask).astype(jnp.float32))) > 0.98


if __name__ == "__main__":
    key = jax.random.PRNGKey(0)
    k_a, k_b = jax.random.split(key)
    _run_case(2, 4, 16, 16, k_a)   # small canonical case (single chunk, N % 128 == 0)
    _run_case(1, 3, 96, 35, k_b)   # multi-chunk loop + padded N + odd W path
    print("KERNEL_OK")
</pallas_src>

<mosaic_0001>
module attributes {stable_mosaic.version = 11 : i64} {
  func.func @_view_synth_kernel(%arg0: i32, %arg1: i32, %arg2: memref<1x1x256xf32, #tpu.memory_space<vmem>>, %arg3: memref<2x48xf32, #tpu.memory_space<smem>>, %arg4: memref<1x1x64x16xbf16, #tpu.memory_space<vmem>>, %arg5: memref<1x4x256xf32, #tpu.memory_space<vmem>>, %arg6: memref<1x1x256xf32, #tpu.memory_space<vmem>>, %arg7: memref<1x1x256xf32, #tpu.memory_space<vmem>>) attributes {dimension_semantics = [#tpu.dimension_semantics<parallel>, #tpu.dimension_semantics<parallel>], iteration_bounds = array<i64: 2, 1>, scalar_prefetch = 0 : i64, scratch_operands = 0 : i64, tpu.core_type = #tpu.core_type<tc>, window_params = [{transform_indices = @transform_0, window_bounds = array<i64: 1, 1, 256>}, {transform_indices = @transform_1, window_bounds = array<i64: 2, 48>}, {transform_indices = @transform_2, window_bounds = array<i64: 1, 1, 64, 16>}, {transform_indices = @transform_3, window_bounds = array<i64: 1, 4, 256>}, {transform_indices = @transform_4, window_bounds = array<i64: 1, 1, 256>}, {transform_indices = @transform_5, window_bounds = array<i64: 1, 1, 256>}]} {
    %0 = arith.index_cast %arg0 : i32 to index
    %c0 = arith.constant 0 : index
    %1 = memref.load %arg3[%0, %c0] : memref<2x48xf32, #tpu.memory_space<smem>>
    %2 = arith.index_cast %arg0 : i32 to index
    %c1 = arith.constant 1 : index
    %3 = memref.load %arg3[%2, %c1] : memref<2x48xf32, #tpu.memory_space<smem>>
    %4 = arith.index_cast %arg0 : i32 to index
    %c2 = arith.constant 2 : index
    %5 = memref.load %arg3[%4, %c2] : memref<2x48xf32, #tpu.memory_space<smem>>
    %6 = arith.index_cast %arg0 : i32 to index
    %c3 = arith.constant 3 : index
    %7 = memref.load %arg3[%6, %c3] : memref<2x48xf32, #tpu.memory_space<smem>>
    %8 = arith.index_cast %arg0 : i32 to index
    %c4 = arith.constant 4 : index
    %9 = memref.load %arg3[%8, %c4] : memref<2x48xf32, #tpu.memory_space<smem>>
    %10 = arith.index_cast %arg0 : i32 to index
    %c5 = arith.constant 5 : index
    %11 = memref.load %arg3[%10, %c5] : memref<2x48xf32, #tpu.memory_space<smem>>
    %12 = arith.index_cast %arg0 : i32 to index
    %c6 = arith.constant 6 : index
    %13 = memref.load %arg3[%12, %c6] : memref<2x48xf32, #tpu.memory_space<smem>>
    %14 = arith.index_cast %arg0 : i32 to index
    %c7 = arith.constant 7 : index
    %15 = memref.load %arg3[%14, %c7] : memref<2x48xf32, #tpu.memory_space<smem>>
    %16 = arith.index_cast %arg0 : i32 to index
    %c8 = arith.constant 8 : index
    %17 = memref.load %arg3[%16, %c8] : memref<2x48xf32, #tpu.memory_space<smem>>
    %18 = arith.index_cast %arg0 : i32 to index
    %c9 = arith.constant 9 : index
    %19 = memref.load %arg3[%18, %c9] : memref<2x48xf32, #tpu.memory_space<smem>>
    %20 = arith.index_cast %arg0 : i32 to index
    %c10 = arith.constant 10 : index
    %21 = memref.load %arg3[%20, %c10] : memref<2x48xf32, #tpu.memory_space<smem>>
    %22 = arith.index_cast %arg0 : i32 to index
    %c11 = arith.constant 11 : index
    %23 = memref.load %arg3[%22, %c11] : memref<2x48xf32, #tpu.memory_space<smem>>
    %24 = arith.index_cast %arg0 : i32 to index
    %c16 = arith.constant 16 : index
    %25 = memref.load %arg3[%24, %c16] : memref<2x48xf32, #tpu.memory_space<smem>>
    %26 = arith.index_cast %arg0 : i32 to index
    %c17 = arith.constant 17 : index
    %27 = memref.load %arg3[%26, %c17] : memref<2x48xf32, #tpu.memory_space<smem>>
    %28 = arith.index_cast %arg0 : i32 to index
    %c18 = arith.constant 18 : index
    %29 = memref.load %arg3[%28, %c18] : memref<2x48xf32, #tpu.memory_space<smem>>
    %30 = arith.index_cast %arg0 : i32 to index
    %c20 = arith.constant 20 : index
    %31 = memref.load %arg3[%30, %c20] : memref<2x48xf32, #tpu.memory_space<smem>>
    %32 = arith.index_cast %arg0 : i32 to index
    %c21 = arith.constant 21 : index
    %33 = memref.load %arg3[%32, %c21] : memref<2x48xf32, #tpu.memory_space<smem>>
    %34 = arith.index_cast %arg0 : i32 to index
    %c22 = arith.constant 22 : index
    %35 = memref.load %arg3[%34, %c22] : memref<2x48xf32, #tpu.memory_space<smem>>
    %36 = arith.index_cast %arg0 : i32 to index
    %c32 = arith.constant 32 : index
    %37 = memref.load %arg3[%36, %c32] : memref<2x48xf32, #tpu.memory_space<smem>>
    %38 = arith.index_cast %arg0 : i32 to index
    %c33 = arith.constant 33 : index
    %39 = memref.load %arg3[%38, %c33] : memref<2x48xf32, #tpu.memory_space<smem>>
    %40 = arith.index_cast %arg0 : i32 to index
    %c34 = arith.constant 34 : index
    %41 = memref.load %arg3[%40, %c34] : memref<2x48xf32, #tpu.memory_space<smem>>
    %42 = arith.index_cast %arg0 : i32 to index
    %c36 = arith.constant 36 : index
    %43 = memref.load %arg3[%42, %c36] : memref<2x48xf32, #tpu.memory_space<smem>>
    %44 = arith.index_cast %arg0 : i32 to index
    %c37 = arith.constant 37 : index
    %45 = memref.load %arg3[%44, %c37] : memref<2x48xf32, #tpu.memory_space<smem>>
    %46 = arith.index_cast %arg0 : i32 to index
    %c38 = arith.constant 38 : index
    %47 = memref.load %arg3[%46, %c38] : memref<2x48xf32, #tpu.memory_space<smem>>
    %48 = arith.index_cast %arg0 : i32 to index
    %c40 = arith.constant 40 : index
    %49 = memref.load %arg3[%48, %c40] : memref<2x48xf32, #tpu.memory_space<smem>>
    %50 = arith.index_cast %arg0 : i32 to index
    %c41 = arith.constant 41 : index
    %51 = memref.load %arg3[%50, %c41] : memref<2x48xf32, #tpu.memory_space<smem>>
    %52 = arith.index_cast %arg0 : i32 to index
    %c42 = arith.constant 42 : index
    %53 = memref.load %arg3[%52, %c42] : memref<2x48xf32, #tpu.memory_space<smem>>
    %54 = tpu.iota {dimensions = array<i32: 1>} : vector<1x256xi32>
    %55 = arith.sitofp %54 : vector<1x256xi32> to vector<1x256xf32>
    %c256_i32 = arith.constant 256 : i32
    %56 = arith.muli %arg1, %c256_i32 : i32
    %57 = arith.sitofp %56 : i32 to f32
    %58 = vector.broadcast %57 : f32 to vector<1x256xf32>
    %59 = arith.addf %55, %58 : vector<1x256xf32>
    %cst = arith.constant 6.250000e-02 : f32
    %60 = vector.broadcast %cst : f32 to vector<1x256xf32>
    %61 = arith.mulf %59, %60 : vector<1x256xf32>
    %62 = math.floor %61 : vector<1x256xf32>
    %cst_0 = arith.constant 1.600000e+01 : f32
    %63 = vector.broadcast %cst_0 : f32 to vector<1x256xf32>
    %64 = arith.mulf %62, %63 : vector<1x256xf32>
    %65 = arith.subf %59, %64 : vector<1x256xf32>
    %cst_1 = arith.constant 0.000000e+00 : f32
    %66 = vector.broadcast %cst_1 : f32 to vector<1x256xf32>
    %67 = arith.cmpf olt, %65, %66 : vector<1x256xf32>
    %cst_2 = arith.constant 1.000000e+00 : f32
    %68 = vector.broadcast %cst_2 : f32 to vector<1x256xf32>
    %69 = arith.subf %62, %68 : vector<1x256xf32>
    %70 = arith.select %67, %69, %62 : vector<1x256xi1>, vector<1x256xf32>
    %cst_3 = arith.constant 1.600000e+01 : f32
    %71 = vector.broadcast %cst_3 : f32 to vector<1x256xf32>
    %72 = arith.addf %65, %71 : vector<1x256xf32>
    %73 = arith.select %67, %72, %65 : vector<1x256xi1>, vector<1x256xf32>
    %cst_4 = arith.constant 1.600000e+01 : f32
    %74 = vector.broadcast %cst_4 : f32 to vector<1x256xf32>
    %75 = arith.cmpf oge, %73, %74 : vector<1x256xf32>
    %cst_5 = arith.constant 1.000000e+00 : f32
    %76 = vector.broadcast %cst_5 : f32 to vector<1x256xf32>
    %77 = arith.addf %70, %76 : vector<1x256xf32>
    %78 = arith.select %75, %77, %70 : vector<1x256xi1>, vector<1x256xf32>
    %cst_6 = arith.constant 1.600000e+01 : f32
    %79 = vector.broadcast %cst_6 : f32 to vector<1x256xf32>
    %80 = arith.subf %73, %79 : vector<1x256xf32>
    %81 = arith.select %75, %80, %73 : vector<1x256xi1>, vector<1x256xf32>
    %c0_7 = arith.constant 0 : index
    %c0_8 = arith.constant 0 : index
    %c0_9 = arith.constant 0 : index
    %82 = vector.load %arg2[%c0_7, %c0_8, %c0_9] : memref<1x1x256xf32, #tpu.memory_space<vmem>>, vector<1x1x256xf32>
    %83 = vector.shape_cast %82 : vector<1x1x256xf32> to vector<1x256xf32>
    %84 = vector.broadcast %37 : f32 to vector<1x256xf32>
    %85 = arith.mulf %84, %81 : vector<1x256xf32>
    %86 = vector.broadcast %39 : f32 to vector<1x256xf32>
    %87 = arith.mulf %86, %78 : vector<1x256xf32>
    %88 = arith.addf %85, %87 : vector<1x256xf32>
    %89 = vector.broadcast %41 : f32 to vector<1x256xf32>
    %90 = arith.addf %88, %89 : vector<1x256xf32>
    %91 = vector.broadcast %43 : f32 to vector<1x256xf32>
    %92 = arith.mulf %91, %81 : vector<1x256xf32>
    %93 = vector.broadcast %45 : f32 to vector<1x256xf32>
    %94 = arith.mulf %93, %78 : vector<1x256xf32>
    %95 = arith.addf %92, %94 : vector<1x256xf32>
    %96 = vector.broadcast %47 : f32 to vector<1x256xf32>
    %97 = arith.addf %95, %96 : vector<1x256xf32>
    %98 = vector.broadcast %49 : f32 to vector<1x256xf32>
    %99 = arith.mulf %98, %81 : vector<1x256xf32>
    %100 = vector.broadcast %51 : f32 to vector<1x256xf32>
    %101 = arith.mulf %100, %78 : vector<1x256xf32>
    %102 = arith.addf %99, %101 : vector<1x256xf32>
    %103 = vector.broadcast %53 : f32 to vector<1x256xf32>
    %104 = arith.addf %102, %103 : vector<1x256xf32>
    %105 = arith.mulf %90, %83 : vector<1x256xf32>
    %106 = arith.mulf %97, %83 : vector<1x256xf32>
    %107 = arith.mulf %104, %83 : vector<1x256xf32>
    %108 = vector.broadcast %1 : f32 to vector<1x256xf32>
    %109 = arith.mulf %108, %105 : vector<1x256xf32>
    %110 = vector.broadcast %3 : f32 to vector<1x256xf32>
    %111 = arith.mulf %110, %106 : vector<1x256xf32>
    %112 = arith.addf %109, %111 : vector<1x256xf32>
    %113 = vector.broadcast %5 : f32 to vector<1x256xf32>
    %114 = arith.mulf %113, %107 : vector<1x256xf32>
    %115 = arith.addf %112, %114 : vector<1x256xf32>
    %116 = vector.broadcast %7 : f32 to vector<1x256xf32>
    %117 = arith.addf %115, %116 : vector<1x256xf32>
    %118 = vector.broadcast %9 : f32 to vector<1x256xf32>
    %119 = arith.mulf %118, %105 : vector<1x256xf32>
    %120 = vector.broadcast %11 : f32 to vector<1x256xf32>
    %121 = arith.mulf %120, %106 : vector<1x256xf32>
    %122 = arith.addf %119, %121 : vector<1x256xf32>
    %123 = vector.broadcast %13 : f32 to vector<1x256xf32>
    %124 = arith.mulf %123, %107 : vector<1x256xf32>
    %125 = arith.addf %122, %124 : vector<1x256xf32>
    %126 = vector.broadcast %15 : f32 to vector<1x256xf32>
    %127 = arith.addf %125, %126 : vector<1x256xf32>
    %128 = vector.broadcast %17 : f32 to vector<1x256xf32>
    %129 = arith.mulf %128, %105 : vector<1x256xf32>
    %130 = vector.broadcast %19 : f32 to vector<1x256xf32>
    %131 = arith.mulf %130, %106 : vector<1x256xf32>
    %132 = arith.addf %129, %131 : vector<1x256xf32>
    %133 = vector.broadcast %21 : f32 to vector<1x256xf32>
    %134 = arith.mulf %133, %107 : vector<1x256xf32>
    %135 = arith.addf %132, %134 : vector<1x256xf32>
    %136 = vector.broadcast %23 : f32 to vector<1x256xf32>
    %137 = arith.addf %135, %136 : vector<1x256xf32>
    %cst_10 = arith.constant 1.1920929E-7 : f32
    %138 = vector.broadcast %cst_10 : f32 to vector<1x256xf32>
    %139 = arith.maximumf %137, %138 : vector<1x256xf32>
    %c0_11 = arith.constant 0 : index
    %c0_12 = arith.constant 0 : index
    %c0_13 = arith.constant 0 : index
    %140 = vector.load %arg6[%c0_11, %c0_12, %c0_13] : memref<1x1x256xf32, #tpu.memory_space<vmem>>, vector<1x1x256xf32>
    %141 = vector.shape_cast %140 : vector<1x1x256xf32> to vector<1x256xf32>
    %142 = vector.shape_cast %139 : vector<1x256xf32> to vector<1x1x256xf32>
    tpu.vector_store %arg6[%c0_11, %c0_12, %c0_13], %142 {strides = array<i32>} : memref<1x1x256xf32, #tpu.memory_space<vmem>>, vector<1x1x256xf32>,
    %cst_14 = arith.constant 1.000000e-01 : f32
    %143 = vector.broadcast %cst_14 : f32 to vector<1x256xf32>
    %144 = arith.maximumf %139, %143 : vector<1x256xf32>
    %145 = tpu.reciprocal %144 {approx = true} : vector<1x256xf32> -> vector<1x256xf32>
    %146 = arith.mulf %144, %145 : vector<1x256xf32>
    %cst_15 = arith.constant 2.000000e+00 : f32
    %147 = vector.broadcast %cst_15 : f32 to vector<1x256xf32>
    %148 = arith.subf %147, %146 : vector<1x256xf32>
    %149 = arith.mulf %145, %148 : vector<1x256xf32>
    %150 = arith.mulf %117, %149 : vector<1x256xf32>
    %151 = arith.mulf %127, %149 : vector<1x256xf32>
    %152 = arith.mulf %137, %149 : vector<1x256xf32>
    %153 = vector.broadcast %25 : f32 to vector<1x256xf32>
    %154 = arith.mulf %153, %150 : vector<1x256xf32>
    %155 = vector.broadcast %27 : f32 to vector<1x256xf32>
    %156 = arith.mulf %155, %151 : vector<1x256xf32>
    %157 = arith.addf %154, %156 : vector<1x256xf32>
    %158 = vector.broadcast %29 : f32 to vector<1x256xf32>
    %159 = arith.mulf %158, %152 : vector<1x256xf32>
    %160 = arith.addf %157, %159 : vector<1x256xf32>
    %161 = vector.broadcast %31 : f32 to vector<1x256xf32>
    %162 = arith.mulf %161, %150 : vector<1x256xf32>
    %163 = vector.broadcast %33 : f32 to vector<1x256xf32>
    %164 = arith.mulf %163, %151 : vector<1x256xf32>
    %165 = arith.addf %162, %164 : vector<1x256xf32>
    %166 = vector.broadcast %35 : f32 to vector<1x256xf32>
    %167 = arith.mulf %166, %152 : vector<1x256xf32>
    %168 = arith.addf %165, %167 : vector<1x256xf32>
    %cst_16 = arith.constant 0.13333334 : f32
    %169 = vector.broadcast %cst_16 : f32 to vector<1x256xf32>
    %170 = arith.mulf %160, %169 : vector<1x256xf32>
    %cst_17 = arith.constant 1.000000e+00 : f32
    %171 = vector.broadcast %cst_17 : f32 to vector<1x256xf32>
    %172 = arith.subf %170, %171 : vector<1x256xf32>
    %cst_18 = arith.constant 0.13333334 : f32
    %173 = vector.broadcast %cst_18 : f32 to vector<1x256xf32>
    %174 = arith.mulf %168, %173 : vector<1x256xf32>
    %cst_19 = arith.constant 1.000000e+00 : f32
    %175 = vector.broadcast %cst_19 : f32 to vector<1x256xf32>
    %176 = arith.subf %174, %175 : vector<1x256xf32>
    %177 = math.absf %172 : vector<1x256xf32>
    %cst_20 = arith.constant 1.000000e+00 : f32
    %178 = vector.broadcast %cst_20 : f32 to vector<1x256xf32>
    %179 = arith.cmpf olt, %177, %178 : vector<1x256xf32>
    %180 = math.absf %176 : vector<1x256xf32>
    %cst_21 = arith.constant 1.000000e+00 : f32
    %181 = vector.broadcast %cst_21 : f32 to vector<1x256xf32>
    %182 = arith.cmpf olt, %180, %181 : vector<1x256xf32>
    %183 = arith.andi %179, %182 : vector<1x256xi1>
    %184 = arith.extui %183 : vector<1x256xi1> to vector<1x256xi32>
    %185 = arith.sitofp %184 : vector<1x256xi32> to vector<1x256xf32>
    %c0_22 = arith.constant 0 : index
    %c0_23 = arith.constant 0 : index
    %c0_24 = arith.constant 0 : index
    %186 = vector.load %arg7[%c0_22, %c0_23, %c0_24] : memref<1x1x256xf32, #tpu.memory_space<vmem>>, vector<1x1x256xf32>
    %187 = vector.shape_cast %186 : vector<1x1x256xf32> to vector<1x256xf32>
    %188 = vector.shape_cast %185 : vector<1x256xf32> to vector<1x1x256xf32>
    tpu.vector_store %arg7[%c0_22, %c0_23, %c0_24], %188 {strides = array<i32>} : memref<1x1x256xf32, #tpu.memory_space<vmem>>, vector<1x1x256xf32>,
    %cst_25 = arith.constant 8.000000e+00 : f32
    %189 = vector.broadcast %cst_25 : f32 to vector<1x256xf32>
    %190 = arith.mulf %172, %189 : vector<1x256xf32>
    %cst_26 = arith.constant 7.500000e+00 : f32
    %191 = vector.broadcast %cst_26 : f32 to vector<1x256xf32>
    %192 = arith.addf %190, %191 : vector<1x256xf32>
    %cst_27 = arith.constant 0.000000e+00 : f32
    %cst_28 = arith.constant 1.500000e+01 : f32
    %193 = vector.broadcast %cst_27 : f32 to vector<1x256xf32>
    %194 = arith.maximumf %193, %192 : vector<1x256xf32>
    %195 = vector.broadcast %cst_28 : f32 to vector<1x256xf32>
    %196 = arith.minimumf %195, %194 : vector<1x256xf32>
    %cst_29 = arith.constant 8.000000e+00 : f32
    %197 = vector.broadcast %cst_29 : f32 to vector<1x256xf32>
    %198 = arith.mulf %176, %197 : vector<1x256xf32>
    %cst_30 = arith.constant 7.500000e+00 : f32
    %199 = vector.broadcast %cst_30 : f32 to vector<1x256xf32>
    %200 = arith.addf %198, %199 : vector<1x256xf32>
    %cst_31 = arith.constant 0.000000e+00 : f32
    %cst_32 = arith.constant 1.500000e+01 : f32
    %201 = vector.broadcast %cst_31 : f32 to vector<1x256xf32>
    %202 = arith.maximumf %201, %200 : vector<1x256xf32>
    %203 = vector.broadcast %cst_32 : f32 to vector<1x256xf32>
    %204 = arith.minimumf %203, %202 : vector<1x256xf32>
    %205 = math.floor %196 : vector<1x256xf32>
    %206 = math.floor %204 : vector<1x256xf32>
    %207 = arith.subf %196, %205 : vector<1x256xf32>
    %208 = arith.subf %204, %206 : vector<1x256xf32>
    %cst_33 = arith.constant 1.000000e+00 : f32
    %209 = vector.broadcast %cst_33 : f32 to vector<1x256xf32>
    %210 = arith.addf %205, %209 : vector<1x256xf32>
    %cst_34 = arith.constant 1.500000e+01 : f32
    %211 = vector.broadcast %cst_34 : f32 to vector<1x256xf32>
    %212 = arith.minimumf %210, %211 : vector<1x256xf32>
    %cst_35 = arith.constant 1.000000e+00 : f32
    %213 = vector.broadcast %cst_35 : f32 to vector<1x256xf32>
    %214 = arith.addf %206, %213 : vector<1x256xf32>
    %cst_36 = arith.constant 1.500000e+01 : f32
    %215 = vector.broadcast %cst_36 : f32 to vector<1x256xf32>
    %216 = arith.minimumf %214, %215 : vector<1x256xf32>
    %cst_37 = arith.constant 1.000000e+00 : f32
    %217 = vector.broadcast %cst_37 : f32 to vector<1x256xf32>
    %218 = arith.subf %217, %207 : vector<1x256xf32>
    %cst_38 = arith.constant 1.000000e+00 : f32
    %219 = vector.broadcast %cst_38 : f32 to vector<1x256xf32>
    %220 = arith.subf %219, %208 : vector<1x256xf32>
    %221 = tpu.iota {dimensions = array<i32: 0>} : vector<16x1xi32>
    %222 = arith.sitofp %221 : vector<16x1xi32> to vector<16x1xf32>
    %223 = vector.broadcast %222 : vector<16x1xf32> to vector<16x256xf32>
    %224 = vector.broadcast %205 : vector<1x256xf32> to vector<16x256xf32>
    %225 = arith.cmpf oeq, %223, %224 : vector<16x256xf32>
    %cst_39 = arith.constant 0.000000e+00 : f32
    %226 = vector.shape_cast %218 : vector<1x256xf32> to vector<1x256xf32>
    %227 = vector.broadcast %226 : vector<1x256xf32> to vector<16x256xf32>
    %228 = vector.broadcast %cst_39 : f32 to vector<16x256xf32>
    %229 = arith.select %225, %227, %228 : vector<16x256xi1>, vector<16x256xf32>
    %230 = vector.broadcast %222 : vector<16x1xf32> to vector<16x256xf32>
    %231 = vector.broadcast %212 : vector<1x256xf32> to vector<16x256xf32>
    %232 = arith.cmpf oeq, %230, %231 : vector<16x256xf32>
    %cst_40 = arith.constant 0.000000e+00 : f32
    %233 = vector.shape_cast %207 : vector<1x256xf32> to vector<1x256xf32>
    %234 = vector.broadcast %233 : vector<1x256xf32> to vector<16x256xf32>
    %235 = vector.broadcast %cst_40 : f32 to vector<16x256xf32>
    %236 = arith.select %232, %234, %235 : vector<16x256xi1>, vector<16x256xf32>
    %237 = arith.addf %229, %236 : vector<16x256xf32>
    %238 = arith.truncf %237 : vector<16x256xf32> to vector<16x256xbf16>
    %239 = tpu.iota {dimensions = array<i32: 0>} : vector<16x1xi32>
    %240 = arith.sitofp %239 : vector<16x1xi32> to vector<16x1xf32>
    %cst_41 = arith.constant 0.000000e+00 : f32
    %241 = vector.broadcast %cst_41 : f32 to vector<1x256xf32>
    %cst_42 = arith.constant 0.000000e+00 : f32
    %242 = vector.broadcast %cst_42 : f32 to vector<1x256xf32>
    %cst_43 = arith.constant 0.000000e+00 : f32
    %243 = vector.broadcast %cst_43 : f32 to vector<1x256xf32>
    %cst_44 = arith.constant 0.000000e+00 : f32
    %244 = vector.broadcast %cst_44 : f32 to vector<1x256xf32>
    %c0_i32 = arith.constant 0 : i32
    %c0_45 = arith.constant 0 : index
    %245 = arith.index_cast %c0_i32 : i32 to index
    %c0_46 = arith.constant 0 : index
    %c0_47 = arith.constant 0 : index
    %246 = vector.load %arg4[%c0_45, %245, %c0_46, %c0_47] : memref<1x1x64x16xbf16, #tpu.memory_space<vmem>>, vector<1x1x64x16xbf16>
    %247 = vector.shape_cast %246 : vector<1x1x64x16xbf16> to vector<64x16xbf16>
    %cst_48 = arith.constant dense<0.000000e+00> : vector<64x256xf32>
    %248 = tpu.matmul %247, %238, %cst_48 {dimension_numbers = #tpu.dot_dimension_numbers<[1], [0], [0], [1], [0, 0, 1, 1], [], []>} : vector<64x16xbf16>, vector<16x256xbf16>, vector<64x256xf32> -> vector<64x256xf32>
    %c16_i32 = arith.constant 16 : i32
    %249 = arith.muli %c0_i32, %c16_i32 : i32
    %250 = arith.sitofp %249 : i32 to f32
    %251 = vector.broadcast %250 : f32 to vector<16x1xf32>
    %252 = arith.addf %240, %251 : vector<16x1xf32>
    %253 = vector.broadcast %252 : vector<16x1xf32> to vector<16x256xf32>
    %254 = vector.broadcast %206 : vector<1x256xf32> to vector<16x256xf32>
    %255 = arith.cmpf oeq, %253, %254 : vector<16x256xf32>
    %cst_49 = arith.constant 0.000000e+00 : f32
    %256 = vector.shape_cast %220 : vector<1x256xf32> to vector<1x256xf32>
    %257 = vector.broadcast %256 : vector<1x256xf32> to vector<16x256xf32>
    %258 = vector.broadcast %cst_49 : f32 to vector<16x256xf32>
    %259 = arith.select %255, %257, %258 : vector<16x256xi1>, vector<16x256xf32>
    %260 = vector.broadcast %252 : vector<16x1xf32> to vector<16x256xf32>
    %261 = vector.broadcast %216 : vector<1x256xf32> to vector<16x256xf32>
    %262 = arith.cmpf oeq, %260, %261 : vector<16x256xf32>
    %cst_50 = arith.constant 0.000000e+00 : f32
    %263 = vector.shape_cast %208 : vector<1x256xf32> to vector<1x256xf32>
    %264 = vector.broadcast %263 : vector<1x256xf32> to vector<16x256xf32>
    %265 = vector.broadcast %cst_50 : f32 to vector<16x256xf32>
    %266 = arith.select %262, %264, %265 : vector<16x256xi1>, vector<16x256xf32>
    %267 = arith.addf %259, %266 : vector<16x256xf32>
    %268 = vector.extract_strided_slice %248 {offsets = [0, 0], sizes = [16, 256], strides = [1, 1]} : vector<64x256xf32> to vector<16x256xf32>
    %269 = arith.mulf %268, %267 : vector<16x256xf32>
    %cst_51 = arith.constant dense<0.000000e+00> : vector<256xf32>
    %270 = vector.multi_reduction <add>, %269, %cst_51 [0] : vector<16x256xf32> to vector<256xf32>
    %271 = vector.shape_cast %270 : vector<256xf32> to vector<1x256xf32>
    %272 = arith.addf %241, %271 : vector<1x256xf32>
    %273 = vector.extract_strided_slice %248 {offsets = [16, 0], sizes = [16, 256], strides = [1, 1]} : vector<64x256xf32> to vector<16x256xf32>
    %274 = arith.mulf %273, %267 : vector<16x256xf32>
    %cst_52 = arith.constant dense<0.000000e+00> : vector<256xf32>
    %275 = vector.multi_reduction <add>, %274, %cst_52 [0] : vector<16x256xf32> to vector<256xf32>
    %276 = vector.shape_cast %275 : vector<256xf32> to vector<1x256xf32>
    %277 = arith.addf %242, %276 : vector<1x256xf32>
    %278 = vector.extract_strided_slice %248 {offsets = [32, 0], sizes = [16, 256], strides = [1, 1]} : vector<64x256xf32> to vector<16x256xf32>
    %279 = arith.mulf %278, %267 : vector<16x256xf32>
    %cst_53 = arith.constant dense<0.000000e+00> : vector<256xf32>
    %280 = vector.multi_reduction <add>, %279, %cst_53 [0] : vector<16x256xf32> to vector<256xf32>
    %281 = vector.shape_cast %280 : vector<256xf32> to vector<1x256xf32>
    %282 = arith.addf %243, %281 : vector<1x256xf32>
    %283 = vector.extract_strided_slice %248 {offsets = [48, 0], sizes = [16, 256], strides = [1, 1]} : vector<64x256xf32> to vector<16x256xf32>
    %284 = arith.mulf %283, %267 : vector<16x256xf32>
    %cst_54 = arith.constant dense<0.000000e+00> : vector<256xf32>
    %285 = vector.multi_reduction <add>, %284, %cst_54 [0] : vector<16x256xf32> to vector<256xf32>
    %286 = vector.shape_cast %285 : vector<256xf32> to vector<1x256xf32>
    %287 = arith.addf %244, %286 : vector<1x256xf32>
    %c1_i32 = arith.constant 1 : i32
    %c0_55 = arith.constant 0 : index
    %c0_56 = arith.constant 0 : index
    %c0_57 = arith.constant 0 : index
    %288 = vector.load %arg5[%c0_55, %c0_56, %c0_57] : memref<1x4x256xf32, #tpu.memory_space<vmem>>, vector<1x1x256xf32>
    %289 = vector.shape_cast %288 : vector<1x1x256xf32> to vector<1x256xf32>
    %290 = vector.shape_cast %272 : vector<1x256xf32> to vector<1x1x256xf32>
    tpu.vector_store %arg5[%c0_55, %c0_56, %c0_57], %290 {strides = array<i32>} : memref<1x4x256xf32, #tpu.memory_space<vmem>>, vector<1x1x256xf32>,
    %c0_58 = arith.constant 0 : index
    %c1_59 = arith.constant 1 : index
    %c0_60 = arith.constant 0 : index
    %291 = vector.load %arg5[%c0_58, %c1_59, %c0_60] : memref<1x4x256xf32, #tpu.memory_space<vmem>>, vector<1x1x256xf32>
    %292 = vector.shape_cast %291 : vector<1x1x256xf32> to vector<1x256xf32>
    %293 = vector.shape_cast %277 : vector<1x256xf32> to vector<1x1x256xf32>
    tpu.vector_store %arg5[%c0_58, %c1_59, %c0_60], %293 {strides = array<i32>} : memref<1x4x256xf32, #tpu.memory_space<vmem>>, vector<1x1x256xf32>,
    %c0_61 = arith.constant 0 : index
    %c2_62 = arith.constant 2 : index
    %c0_63 = arith.constant 0 : index
    %294 = vector.load %arg5[%c0_61, %c2_62, %c0_63] : memref<1x4x256xf32, #tpu.memory_space<vmem>>, vector<1x1x256xf32>
    %295 = vector.shape_cast %294 : vector<1x1x256xf32> to vector<1x256xf32>
    %296 = vector.shape_cast %282 : vector<1x256xf32> to vector<1x1x256xf32>
    tpu.vector_store %arg5[%c0_61, %c2_62, %c0_63], %296 {strides = array<i32>} : memref<1x4x256xf32, #tpu.memory_space<vmem>>, vector<1x1x256xf32>,
    %c0_64 = arith.constant 0 : index
    %c3_65 = arith.constant 3 : index
    %c0_66 = arith.constant 0 : index
    %297 = vector.load %arg5[%c0_64, %c3_65, %c0_66] : memref<1x4x256xf32, #tpu.memory_space<vmem>>, vector<1x1x256xf32>
    %298 = vector.shape_cast %297 : vector<1x1x256xf32> to vector<1x256xf32>
    %299 = vector.shape_cast %287 : vector<1x256xf32> to vector<1x1x256xf32>
    tpu.vector_store %arg5[%c0_64, %c3_65, %c0_66], %299 {strides = array<i32>} : memref<1x4x256xf32, #tpu.memory_space<vmem>>, vector<1x1x256xf32>,
    return
  }
  func.func @transform_0(%arg0: i32, %arg1: i32) -> (i32, i32, i32) {
    %c0_i32 = arith.constant 0 : i32
    %c0_i32_0 = arith.constant 0 : i32
    return %arg0, %c0_i32, %arg1 : i32, i32, i32
  }
  func.func @transform_1(%arg0: i32, %arg1: i32) -> (i32, i32) {
    %c0_i32 = arith.constant 0 : i32
    %c0_i32_0 = arith.constant 0 : i32
    %c0_i32_1 = arith.constant 0 : i32
    return %c0_i32, %c0_i32_0 : i32, i32
  }
  func.func @transform_2(%arg0: i32, %arg1: i32) -> (i32, i32, i32, i32) {
    %c0_i32 = arith.constant 0 : i32
    %c0_i32_0 = arith.constant 0 : i32
    %c0_i32_1 = arith.constant 0 : i32
    %c0_i32_2 = arith.constant 0 : i32
    return %arg0, %c0_i32, %c0_i32_0, %c0_i32_1 : i32, i32, i32, i32
  }
  func.func @transform_3(%arg0: i32, %arg1: i32) -> (i32, i32, i32) {
    %c0_i32 = arith.constant 0 : i32
    %c0_i32_0 = arith.constant 0 : i32
    return %arg0, %c0_i32, %arg1 : i32, i32, i32
  }
  func.func @transform_4(%arg0: i32, %arg1: i32) -> (i32, i32, i32) {
    %c0_i32 = arith.constant 0 : i32
    %c0_i32_0 = arith.constant 0 : i32
    return %arg0, %c0_i32, %arg1 : i32, i32, i32
  }
  func.func @transform_5(%arg0: i32, %arg1: i32) -> (i32, i32, i32) {
    %c0_i32 = arith.constant 0 : i32
    %c0_i32_0 = arith.constant 0 : i32
    return %arg0, %c0_i32, %arg1 : i32, i32, i32
  }
}

</mosaic_0001>

<llo_original>
// kernel: tpu_custom_call.1
$region0: #{tpu_custom_call.1}
  #allocation0 [shape = 'u32[]', space=smem, size = 0x4, offset = 0x4, fixed_abs, tag = 'smem constant byte address 0x4 - core index']
  #allocation1 [shape = 'u32[72,128]{1,0:T(1,128)}', space=vmem, size = 0x9000, scoped, tag = 'internal scratch']
  %s0 = inlined_call_operand.vmem [shape: f32[2,1,256], index: 0, kind: input, shape index: {}]
  %s1 = inlined_call_operand.vmem [shape: f32[2,48], index: 1, kind: input, shape index: {}]
  %s2 = inlined_call_operand.vmem [shape: bf16[2,1,64,16], index: 2, kind: input, shape index: {}]
  %s3 = inlined_call_operand.hbm [shape: f32[2,4,256], index: 3, kind: output, shape index: {0}]
  %s4 = inlined_call_operand.hbm [shape: f32[2,1,256], index: 4, kind: output, shape index: {1}]
  %s5 = inlined_call_operand.hbm [shape: f32[2,1,256], index: 5, kind: output, shape index: {2}]
  %6 = xla_tuple %s3, %s4, %s5
  %s7 = sld [smem:[#allocation0]]
  $region65: #{tpu_custom_call.1} parent=0
    _
  %s9 = ssub.s32 1, %s7
  %s10 = scalar_select 0, %s9, %s7
  $region1: #{tpu_custom_call.1} parent=0
    #allocation2 [shape = 'u8[1024]{0}', space=smem, size = 0x400, scoped, tag = 'input window, operand 1, single buffered']
    #allocation3 [shape = 's32[2]{0}', space=sflag, size = 0x8, scoped, tag = 'scoped memory for tpu_custom_call.1']
    #allocation4 [shape = 's32[2]{0}', space=sflag, size = 0x8, scoped, tag = 'scoped memory for tpu_custom_call.1']
    #allocation5 [shape = 'u8[8192]{0}', space=vmem, size = 0x2000, scoped, tag = 'output window, operand 0']
    #allocation6 [shape = 'u8[2048]{0}', space=vmem, size = 0x800, scoped, tag = 'output window, operand 1']
    #allocation7 [shape = 's32[2]{0}', space=sflag, size = 0x8, scoped, tag = 'scoped memory for tpu_custom_call.1']
    #allocation8 [shape = 'u8[2048]{0}', space=vmem, size = 0x800, scoped, tag = 'output window, operand 2']
    %11 = vsyncpa [#allocation4], 0
    %12 = vsyncpa [#allocation3], 0
    %s13 = scalar_lea.sflag [#allocation3], 1
    %14 = vsyncpa %s13, 0
    %15 = vsyncpa [#allocation7], 0
    %s16 = scalar_lea.sflag [#allocation7], 1
    %17 = vsyncpa %s16, 0
    loop: start=0, step=1, limit=4
    $region2: #{tpu_custom_call.1} parent=1 // loop_pre_header
      _
    $region3: #{tpu_custom_call.1} parent=1 // loop_header
      %s19 = sphi 0, %s23
      %p20 = scmp.ge.s32.totalorder %s19, 4
      %s26 = sphi 0, %s38
      %s27 = sphi 0, %s34
      %s28 = sphi 0, %s26
      %s29 = sphi 0, %s27
      %s30 = sphi 0, %s28
      %s31 = sphi 0, %s29
      %s43 = sphi 0, %s45
      %s46 = sphi 0, %s43
      %s47 = sphi 0, %s46
      %s63 = sphi 0, %s47
      %s67 = sphi 0, %s67
      %s69 = sphi 0, %s67
      %s70 = sphi 0, %s69
      %s84 = sphi 0, %s70
      %s90 = sphi 0, %s92
      %s93 = sphi 0, %s90
      %s94 = sphi 0, %s93
      %s110 = sphi 0, %s94
      %s118 = sphi 0, %s120
      %s121 = sphi 0, %s118
      %s122 = sphi 0, %s121
      %s138 = sphi 0, %s122
      %s146 = sphi 0, %s148
      %s149 = sphi 0, %s146
      %s150 = sphi 0, %s149
      %s166 = sphi 0, %s150
      %s174 = sphi 0, %s176
      %s177 = sphi 0, %s174
      %s178 = sphi 0, %s177
      %s194 = sphi 0, %s178
    $region4: #{tpu_custom_call.1} parent=1 // loop_header_branch
      %22 = sbr.rel (%p20) target = $region8
    $region5: #{tpu_custom_call.1} parent=1 // loop_body
      %s24 = ssub.s32 %s19, 1
      %s25 = ssub.s32 %s19, 2
      %s32 = sadd.s32 1, %s27
      %p33 = scmp.ge.s32.totalorder %s32, 1
      %s34 = scalar_select %p33, 0, %s32
      %s35 = sadd.s32 1, %s26
      %s36 = scalar_select %p33, %s35, %s26
      %p37 = scmp.ge.s32.totalorder %s36, 2
      %s38 = scalar_select %p37, 0, %s36
      %s39 = ssub.s32 %s26, %s38
      %s40 = ssub.s32 %s27, %s34
      %s41 = sor.u32 %s39, %s40
      %p42 = scmp.eq.s32.totalorder %s41, 0
      %s44 = sadd.s32 %s43, 1
      %s45 = scalar_select %p42, %s43, %s44
      %p48 = pneg %p42
      %p49 = scmp.eq.s32.totalorder %s19, 1
      %p50 = por %p48, %p49
      %p51 = scmp.ne.s32.totalorder %s43, %s46
      %p52 = scmp.eq.s32.totalorder %s19, 0
      %p53 = por %p51, %p52
      %p54 = scmp.ne.s32.totalorder %s43, %s46
      %p55 = scmp.eq.s32.totalorder %s24, 1
      %p56 = por %p54, %p55
      %p57 = scmp.ne.s32.totalorder %s46, %s47
      %p58 = scmp.eq.s32.totalorder %s24, 0
      %p59 = por %p57, %p58
      %p60 = scmp.ne.s32.totalorder %s46, %s47
      %p61 = scmp.eq.s32.totalorder %s25, 1
      %p62 = por %p60, %p61
      %p64 = scmp.ne.s32.totalorder %s47, %s63
      %p65 = scmp.eq.s32.totalorder %s25, 0
      %p66 = por %p64, %p65
      %s68 = sadd.s32 %s67, 1
      %p71 = scmp.eq.s32.totalorder %s19, 1
      %p72 = scmp.ne.s32.totalorder %s67, %s69
      %p73 = scmp.eq.s32.totalorder %s19, 0
      %p74 = por %p72, %p73
      %p75 = scmp.ne.s32.totalorder %s67, %s69
      %p76 = scmp.eq.s32.totalorder %s24, 1
      %p77 = por %p75, %p76
      %p78 = scmp.ne.s32.totalorder %s69, %s70
      %p79 = scmp.eq.s32.totalorder %s24, 0
      %p80 = por %p78, %p79
      %p81 = scmp.ne.s32.totalorder %s69, %s70
      %p82 = scmp.eq.s32.totalorder %s25, 1
      %p83 = por %p81, %p82
      %p85 = scmp.ne.s32.totalorder %s70, %s84
      %p86 = scmp.eq.s32.totalorder %s25, 0
      %p87 = por %p85, %p86
      %s88 = ssub.s32 %s26, %s38
      %p89 = scmp.eq.s32.totalorder %s88, 0
      %s91 = sadd.s32 %s90, 1
      %s92 = scalar_select %p89, %s90, %s91
      %p95 = pneg %p89
      %p96 = scmp.eq.s32.totalorder %s19, 1
      %p97 = por %p95, %p96
      %p98 = scmp.ne.s32.totalorder %s90, %s93
      %p99 = scmp.eq.s32.totalorder %s19, 0
      %p100 = por %p98, %p99
      %p101 = scmp.ne.s32.totalorder %s90, %s93
      %p102 = scmp.eq.s32.totalorder %s24, 1
      %p103 = por %p101, %p102
      %p104 = scmp.ne.s32.totalorder %s93, %s94
      %p105 = scmp.eq.s32.totalorder %s24, 0
      %p106 = por %p104, %p105
      %p107 = scmp.ne.s32.totalorder %s93, %s94
      %p108 = scmp.eq.s32.totalorder %s25, 1
      %p109 = por %p107, %p108
      %p111 = scmp.ne.s32.totalorder %s94, %s110
      %p112 = scmp.eq.s32.totalorder %s25, 0
      %p113 = por %p111, %p112
      %s114 = ssub.s32 %s26, %s38
      %s115 = ssub.s32 %s27, %s34
      %s116 = sor.u32 %s114, %s115
      %p117 = scmp.eq.s32.totalorder %s116, 0
      %s119 = sadd.s32 %s118, 1
      %s120 = scalar_select %p117, %s118, %s119
      %p123 = pneg %p117
      %p124 = scmp.eq.s32.totalorder %s19, 1
      %p125 = por %p123, %p124
      %p126 = scmp.ne.s32.totalorder %s118, %s121
      %p127 = scmp.eq.s32.totalorder %s19, 0
      %p128 = por %p126, %p127
      %p129 = scmp.ne.s32.totalorder %s118, %s121
      %p130 = scmp.eq.s32.totalorder %s24, 1
      %p131 = por %p129, %p130
      %p132 = scmp.ne.s32.totalorder %s121, %s122
      %p133 = scmp.eq.s32.totalorder %s24, 0
      %p134 = por %p132, %p133
      %p135 = scmp.ne.s32.totalorder %s121, %s122
      %p136 = scmp.eq.s32.totalorder %s25, 1
      %p137 = por %p135, %p136
      %p139 = scmp.ne.s32.totalorder %s122, %s138
      %p140 = scmp.eq.s32.totalorder %s25, 0
      %p141 = por %p139, %p140
      %s142 = ssub.s32 %s26, %s38
      %s143 = ssub.s32 %s27, %s34
      %s144 = sor.u32 %s142, %s143
      %p145 = scmp.eq.s32.totalorder %s144, 0
      %s147 = sadd.s32 %s146, 1
      %s148 = scalar_select %p145, %s146, %s147
      %p151 = pneg %p145
      %p152 = scmp.eq.s32.totalorder %s19, 1
      %p153 = por %p151, %p152
      %p154 = scmp.ne.s32.totalorder %s146, %s149
      %p155 = scmp.eq.s32.totalorder %s19, 0
      %p156 = por %p154, %p155
      %p157 = scmp.ne.s32.totalorder %s146, %s149
      %p158 = scmp.eq.s32.totalorder %s24, 1
      %p159 = por %p157, %p158
      %p160 = scmp.ne.s32.totalorder %s149, %s150
      %p161 = scmp.eq.s32.totalorder %s24, 0
      %p162 = por %p160, %p161
      %p163 = scmp.ne.s32.totalorder %s149, %s150
      %p164 = scmp.eq.s32.totalorder %s25, 1
      %p165 = por %p163, %p164
      %p167 = scmp.ne.s32.totalorder %s150, %s166
      %p168 = scmp.eq.s32.totalorder %s25, 0
      %p169 = por %p167, %p168
      %s170 = ssub.s32 %s26, %s38
      %s171 = ssub.s32 %s27, %s34
      %s172 = sor.u32 %s170, %s171
      %p173 = scmp.eq.s32.totalorder %s172, 0
      %s175 = sadd.s32 %s174, 1
      %s176 = scalar_select %p173, %s174, %s175
      %p179 = pneg %p173
      %p180 = scmp.eq.s32.totalorder %s19, 1
      %p181 = por %p179, %p180
      %p182 = scmp.ne.s32.totalorder %s174, %s177
      %p183 = scmp.eq.s32.totalorder %s19, 0
      %p184 = por %p182, %p183
      %p185 = scmp.ne.s32.totalorder %s174, %s177
      %p186 = scmp.eq.s32.totalorder %s24, 1
      %p187 = por %p185, %p186
      %p188 = scmp.ne.s32.totalorder %s177, %s178
      %p189 = scmp.eq.s32.totalorder %s24, 0
      %p190 = por %p188, %p189
      %p191 = scmp.ne.s32.totalorder %s177, %s178
      %p192 = scmp.eq.s32.totalorder %s25, 1
      %p193 = por %p191, %p192
      %p195 = scmp.ne.s32.totalorder %s178, %s194
      %p196 = scmp.eq.s32.totalorder %s25, 0
      %p197 = por %p195, %p196
      %p198 = scmp.le.s32.totalorder 1, %s19
      %p199 = scmp.lt.s32.totalorder %s19, 3
      %p200 = pnand %p198, %p199
      %p201 = pneg %p200
      // Predicated region
      $region9: #{tpu_custom_call.1} parent=5 // pred_check
        _
      $region10: #{tpu_custom_call.1} parent=5 // pred_check_branch
        %203 = sbr.rel (%p200) target = $region12
      $region11: #{tpu_custom_call.1} parent=5 // pred_region
        %s204 = ssub.s32 %s19, 1
        // Predicated region
        $region13: #{tpu_custom_call.1} parent=11 // pred_check
          %p205 = pneg %p80
        $region14: #{tpu_custom_call.1} parent=11 // pred_check_branch
          %207 = sbr.rel (%p205) target = $region16
        $region15: #{tpu_custom_call.1} parent=11 // pred_region
          %209 = vsyncadd [#allocation4], 0
          %s211 = sshll.u32 %s1, 4
          %s212 = int_to_ptr.vmem [resolvable:$true] %s211
          %214 = dma.vmem_to_smem %s212, 32, [#allocation2], [#allocation4]
        $region16: #{tpu_custom_call.1} parent=11 // pred_fallthru
          _
      $region12: #{tpu_custom_call.1} parent=5 // pred_fallthru
        _
      %p215 = scmp.lt.s32.totalorder %s19, 2
      // Predicated region
      $region17: #{tpu_custom_call.1} parent=5 // pred_check
        %p216 = pneg %p215
      $region18: #{tpu_custom_call.1} parent=5 // pred_check_branch
        %218 = sbr.rel (%p216) target = $region20
      $region19: #{tpu_custom_call.1} parent=5 // pred_region
        // Predicated region
        $region21: #{tpu_custom_call.1} parent=19 // pred_check
          %p219 = pneg %p53
        $region22: #{tpu_custom_call.1} parent=19 // pred_check_branch
          %221 = sbr.rel (%p219) target = $region24
        $region23: #{tpu_custom_call.1} parent=19 // pred_region
          %s222 = smul.u32 2, %s27
          %p223 = scmp.lt.s32.totalorder %s26, 1
          %s224 = scalar_select %p223, %s26, 1
          %p225 = scmp.lt.s32.totalorder %s222, 1
          %s226 = scalar_select %p225, %s222, 1
          %s227 = smul.addr %s224, 2
          %s228 = sadd.s32 %s226, %s227
          %s229 = scalar_lea.vmem %s0, %s228
          %s230 = smul.u32 2, %s27
        $region24: #{tpu_custom_call.1} parent=19 // pred_fallthru
          _
        // Predicated region
        $region25: #{tpu_custom_call.1} parent=19 // pred_check
          %p231 = pneg %p100
        $region26: #{tpu_custom_call.1} parent=19 // pred_check_branch
          %233 = sbr.rel (%p231) target = $region28
        $region27: #{tpu_custom_call.1} parent=19 // pred_region
          %p234 = scmp.lt.s32.totalorder %s26, 1
          %s235 = scalar_select %p234, %s26, 1
          %s236 = smul.addr %s235, 8
          %s237 = smul.addr %s236, 4
          %s238 = scalar_lea.vmem %s2, %s237
        $region28: #{tpu_custom_call.1} parent=19 // pred_fallthru
          _
      $region20: #{tpu_custom_call.1} parent=5 // pred_fallthru
        _
      %p239 = scmp.le.s32.totalorder 1, %s19
      %p240 = scmp.lt.s32.totalorder %s19, 3
      %p241 = pnand %p239, %p240
      %p242 = pneg %p241
      // Predicated region
      $region29: #{tpu_custom_call.1} parent=5 // pred_check
        _
      $region30: #{tpu_custom_call.1} parent=5 // pred_check_branch
        %244 = sbr.rel (%p241) target = $region32
      $region31: #{tpu_custom_call.1} parent=5 // pred_region
        %s245 = ssub.s32 %s19, 1
        // Predicated region
        $region33: #{tpu_custom_call.1} parent=31 // pred_check
          %p246 = pneg %p80
        $region34: #{tpu_custom_call.1} parent=31 // pred_check_branch
          %248 = sbr.rel (%p246) target = $region36
        $region35: #{tpu_custom_call.1} parent=31 // pred_region
          %250 = dma.done [#allocation4], 32
        $region36: #{tpu_custom_call.1} parent=31 // pred_fallthru
          _
        %251 = sfence
        %s252 = smul.u32 2, %s29
        %p253 = scmp.lt.s32.totalorder %s28, 1
        %s254 = scalar_select %p253, %s28, 1
        %p255 = scmp.lt.s32.totalorder %s252, 1
        %s256 = scalar_select %p255, %s252, 1
        %s257 = smul.addr %s254, 2
        %s258 = sadd.s32 %s256, %s257
        %s259 = scalar_lea.vmem %s0, %s258
        %p260 = pneg %p59
        %p261 = pneg %p56
        %p262 = pneg %p80
        %p263 = pneg %p77
        %p264 = scmp.lt.s32.totalorder %s28, 1
        %s265 = scalar_select %p264, %s28, 1
        %s266 = smul.addr %s265, 8
        %s267 = smul.addr %s266, 4
        %s268 = scalar_lea.vmem %s2, %s267
        %p269 = pneg %p106
        %p270 = pneg %p103
        %p271 = pneg %p134
        %p272 = pneg %p131
        %s273 = sand.u32 %s121, 1
        %s274 = scalar_lea.sflag [#allocation3], %s273
        %s275 = sand.u32 %s121, 1
        %s276 = smul.addr %s275, 8
        %s277 = scalar_lea.vmem [#allocation5], %s276
        %p278 = pneg %p162
        %p279 = pneg %p159
        %s280 = sand.u32 %s24, 1
        %s281 = scalar_lea.sflag [#allocation7], %s280
        %s282 = sand.u32 %s149, 1
        %s283 = smul.addr %s282, 2
        %s284 = scalar_lea.vmem [#allocation6], %s283
        %p285 = pneg %p190
        %p286 = pneg %p187
        %s287 = sand.u32 %s24, 1
        %s288 = scalar_lea.sflag [#allocation7], %s287
        %s289 = sand.u32 %s177, 1
        %s290 = smul.addr %s289, 2
        %s291 = scalar_lea.vmem [#allocation8], %s290
        %s292 = smul.u32 2, %s29
        %p293 = scmp.lt.s32.totalorder %s28, 1
        %s294 = scalar_select %p293, %s28, 1
        %p295 = scmp.lt.s32.totalorder %s292, 1
        %s296 = scalar_select %p295, %s292, 1
        %s297 = smul.addr %s294, 2
        %s298 = sadd.s32 %s296, %s297
        %s299 = scalar_lea.vmem %s0, %s298
        %s300 = smul.u32 2, %s29
        %p301 = scmp.lt.s32.totalorder %s28, 1
        %s302 = scalar_select %p301, %s28, 1
        %s303 = smul.addr %s302, 8
        %s304 = smul.addr %s303, 4
        %s305 = scalar_lea.vmem %s2, %s304
        %s306 = smul.u32 2, %s29
        %s307 = smul.u32 2, %s29
        %s308 = smul.u32 2, %s29
        %s310 = smul.u32 %s28, 128
        %s311 = sld [smem:[#allocation2 + %s310]]
        %s312 = sadd.s32 %s310, 1
        %s313 = sld [smem:[#allocation2 + %s312]]
        %s314 = sadd.s32 %s310, 2
        %s315 = sld [smem:[#allocation2 + %s314]]
        %s316 = sadd.s32 %s310, 3
        %s317 = sld [smem:[#allocation2 + %s316]]
        %s318 = sadd.s32 %s310, 4
        %s319 = sld [smem:[#allocation2 + %s318]]
        %s320 = sadd.s32 %s310, 5
        %s321 = sld [smem:[#allocation2 + %s320]]
        %s322 = sadd.s32 %s310, 6
        %s323 = sld [smem:[#allocation2 + %s322]]
        %s324 = sadd.s32 %s310, 7
        %s325 = sld [smem:[#allocation2 + %s324]]
        %s326 = sadd.s32 %s310, 8
        %s327 = sld [smem:[#allocation2 + %s326]]
        %s328 = sadd.s32 %s310, 9
        %s329 = sld [smem:[#allocation2 + %s328]]
        %s330 = sadd.s32 %s310, 10
        %s331 = sld [smem:[#allocation2 + %s330]]
        %s332 = sadd.s32 %s310, 11
        %s333 = sld [smem:[#allocation2 + %s332]]
        %s334 = sadd.s32 %s310, 16
        %s335 = sld [smem:[#allocation2 + %s334]]
        %s336 = sadd.s32 %s310, 17
        %s337 = sld [smem:[#allocation2 + %s336]]
        %s338 = sadd.s32 %s310, 18
        %s339 = sld [smem:[#allocation2 + %s338]]
        %s340 = sadd.s32 %s310, 20
        %s341 = sld [smem:[#allocation2 + %s340]]
        %s342 = sadd.s32 %s310, 21
        %s343 = sld [smem:[#allocation2 + %s342]]
        %s344 = sadd.s32 %s310, 22
        %s345 = sld [smem:[#allocation2 + %s344]]
        %s346 = sadd.s32 %s310, 32
        %s347 = sld [smem:[#allocation2 + %s346]]
        %s348 = sadd.s32 %s310, 33
        %s349 = sld [smem:[#allocation2 + %s348]]
        %s350 = sadd.s32 %s310, 34
        %s351 = sld [smem:[#allocation2 + %s350]]
        %s352 = sadd.s32 %s310, 36
        %s353 = sld [smem:[#allocation2 + %s352]]
        %s354 = sadd.s32 %s310, 37
        %s355 = sld [smem:[#allocation2 + %s354]]
        %s356 = sadd.s32 %s310, 38
        %s357 = sld [smem:[#allocation2 + %s356]]
        %s358 = sadd.s32 %s310, 40
        %s359 = sld [smem:[#allocation2 + %s358]]
        %s360 = sadd.s32 %s310, 41
        %s361 = sld [smem:[#allocation2 + %s360]]
        %s362 = sadd.s32 %s310, 42
        %s363 = sld [smem:[#allocation2 + %s362]]
        %v364 = vlaneseq
        %v365 = vand.u32 %v364, 127
        %v366 = vadd.s32 %v365, 128
        %v367 = vcvt.s32.f32 %v365
        %v368 = vcvt.s32.f32 %v366
        %s369 = smul.u32 %s29, 256
        %s370 = scvt.s32.f32 %s369
        %v371 = vstv %s370
        %v372 = vadd.f32 %v367, %v371
        %v373 = vadd.f32 %v368, %v371
        %v374 = vmul.f32 %v372, 0.0625
        %v375 = vmul.f32 %v373, 0.0625
        %v376 = vfloor.f32 %v374
        %v377 = vfloor.f32 %v375
        %v378 = vmul.f32 %v376, 16.0
        %v379 = vmul.f32 %v377, 16.0
        %v380 = vsub.f32 %v372, %v378
        %v381 = vsub.f32 %v373, %v379
        %vm382 = vcmp.lt.f32.partialorder %v380, 0.0
        %vm383 = vcmp.lt.f32.partialorder %v381, 0.0
        %v384 = vsub.f32 %v376, 1.0
        %v385 = vsub.f32 %v377, 1.0
        %v386 = vsel %vm382, %v384, %v376
        %v387 = vsel %vm383, %v385, %v377
        %v388 = vadd.f32 %v380, 16.0
        %v389 = vadd.f32 %v381, 16.0
        %v390 = vsel %vm382, %v388, %v380
        %v391 = vsel %vm383, %v389, %v381
        %vm392 = vcmp.ge.f32.partialorder %v390, 16.0
        %vm393 = vcmp.ge.f32.partialorder %v391, 16.0
        %v394 = vadd.f32 %v386, 1.0
        %v395 = vadd.f32 %v387, 1.0
        %v396 = vsel %vm392, %v394, %v386
        %v397 = vsel %vm393, %v395, %v387
        %v398 = vsub.f32 %v390, 16.0
        %v399 = vsub.f32 %v391, 16.0
        %v400 = vsel %vm392, %v398, %v390
        %v401 = vsel %vm393, %v399, %v391
        %v402 = vld [vmem:[%s299] sm:$0x3]
        %v403 = vstv %s347
        %v404 = vmul.f32 %v403, %v400
        %v405 = vmul.f32 %v403, %v401
        %v406 = vstv %s349
        %v407 = vmul.f32 %v406, %v396
        %v408 = vmul.f32 %v406, %v397
        %v409 = vadd.f32 %v404, %v407
        %v410 = vadd.f32 %v405, %v408
        %v411 = vstv %s351
        %v412 = vadd.f32 %v409, %v411
        %v413 = vadd.f32 %v410, %v411
        %v414 = vstv %s353
        %v415 = vmul.f32 %v414, %v400
        %v416 = vmul.f32 %v414, %v401
        %v417 = vstv %s355
        %v418 = vmul.f32 %v417, %v396
        %v419 = vmul.f32 %v417, %v397
        %v420 = vadd.f32 %v415, %v418
        %v421 = vadd.f32 %v416, %v419
        %v422 = vstv %s357
        %v423 = vadd.f32 %v420, %v422
        %v424 = vadd.f32 %v421, %v422
        %v425 = vstv %s359
        %v426 = vmul.f32 %v425, %v400
        %v427 = vmul.f32 %v425, %v401
        %v428 = vstv %s361
        %v429 = vmul.f32 %v428, %v396
        %v430 = vmul.f32 %v428, %v397
        %v431 = vadd.f32 %v426, %v429
        %v432 = vadd.f32 %v427, %v430
        %v433 = vstv %s363
        %v434 = vadd.f32 %v431, %v433
        %v435 = vadd.f32 %v432, %v433
        %v437 = vperm.slane %v402, 0
        %v438 = vperm.slane %v402, 1
        %v441 = vmul.f32 %v412, %v437
        %v442 = vmul.f32 %v413, %v438
        %v443 = vmul.f32 %v423, %v437
        %v444 = vmul.f32 %v424, %v438
        %v445 = vmul.f32 %v434, %v437
        %v446 = vmul.f32 %v435, %v438
        %v447 = vstv %s311
        %v448 = vmul.f32 %v447, %v441
        %v449 = vmul.f32 %v447, %v442
        %v450 = vstv %s313
        %v451 = vmul.f32 %v450, %v443
        %v452 = vmul.f32 %v450, %v444
        %v453 = vadd.f32 %v448, %v451
        %v454 = vadd.f32 %v449, %v452
        %v455 = vstv %s315
        %v456 = vmul.f32 %v455, %v445
        %v457 = vmul.f32 %v455, %v446
        %v458 = vadd.f32 %v453, %v456
        %v459 = vadd.f32 %v454, %v457
        %v460 = vstv %s317
        %v461 = vadd.f32 %v458, %v460
        %v462 = vadd.f32 %v459, %v460
        %v463 = vstv %s319
        %v464 = vmul.f32 %v463, %v441
        %v465 = vmul.f32 %v463, %v442
        %v466 = vstv %s321
        %v467 = vmul.f32 %v466, %v443
        %v468 = vmul.f32 %v466, %v444
        %v469 = vadd.f32 %v464, %v467
        %v470 = vadd.f32 %v465, %v468
        %v471 = vstv %s323
        %v472 = vmul.f32 %v471, %v445
        %v473 = vmul.f32 %v471, %v446
        %v474 = vadd.f32 %v469, %v472
        %v475 = vadd.f32 %v470, %v473
        %v476 = vstv %s325
        %v477 = vadd.f32 %v474, %v476
        %v478 = vadd.f32 %v475, %v476
        %v479 = vstv %s327
        %v480 = vmul.f32 %v479, %v441
        %v481 = vmul.f32 %v479, %v442
        %v482 = vstv %s329
        %v483 = vmul.f32 %v482, %v443
        %v484 = vmul.f32 %v482, %v444
        %v485 = vadd.f32 %v480, %v483
        %v486 = vadd.f32 %v481, %v484
        %v487 = vstv %s331
        %v488 = vmul.f32 %v487, %v445
        %v489 = vmul.f32 %v487, %v446
        %v490 = vadd.f32 %v485, %v488
        %v491 = vadd.f32 %v486, %v489
        %v492 = vstv %s333
        %v493 = vadd.f32 %v490, %v492
        %v494 = vadd.f32 %v491, %v492
        %v495 = vmax.f32 %v493, 1.1920929e-07
        %v496 = vmax.f32 %v494, 1.1920929e-07
        %v499 = vrot.slane %v496, 7
        %vm500 = vcmask 1040384
        %v501 = vsel %vm500, %v495, %v499
        %v503 = vlaneseq
        %vm504 = vcmp.ge.s32.totalorder %v503, 0
        %vm505 = vcmp.lt.s32.totalorder %v503, 256
        %vm506 = vmand %vm504, %vm505
        %507 = vst.msk [vmem:[%s284] sm:$0x3] %vm506, %v501
        %v508 = vmax.f32 %v495, 0.1
        %v509 = vmax.f32 %v496, 0.1
        %v510 = vrcp.pop %v508
        %v511 = vrcp.pop %v509
        %v512 = vmul.f32 %v508, %v510
        %v513 = vmul.f32 %v509, %v511
        %v514 = vsub.f32 2.0, %v512
        %v515 = vsub.f32 2.0, %v513
        %v516 = vmul.f32 %v510, %v514
        %v517 = vmul.f32 %v511, %v515
        %v518 = vmul.f32 %v461, %v516
        %v519 = vmul.f32 %v462, %v517
        %v520 = vmul.f32 %v477, %v516
        %v521 = vmul.f32 %v478, %v517
        %v522 = vmul.f32 %v493, %v516
        %v523 = vmul.f32 %v494, %v517
        %v524 = vstv %s335
        %v525 = vmul.f32 %v524, %v518
        %v526 = vmul.f32 %v524, %v519
        %v527 = vstv %s337
        %v528 = vmul.f32 %v527, %v520
        %v529 = vmul.f32 %v527, %v521
        %v530 = vadd.f32 %v525, %v528
        %v531 = vadd.f32 %v526, %v529
        %v532 = vstv %s339
        %v533 = vmul.f32 %v532, %v522
        %v534 = vmul.f32 %v532, %v523
        %v535 = vadd.f32 %v530, %v533
        %v536 = vadd.f32 %v531, %v534
        %v537 = vstv %s341
        %v538 = vmul.f32 %v537, %v518
        %v539 = vmul.f32 %v537, %v519
        %v540 = vstv %s343
        %v541 = vmul.f32 %v540, %v520
        %v542 = vmul.f32 %v540, %v521
        %v543 = vadd.f32 %v538, %v541
        %v544 = vadd.f32 %v539, %v542
        %v545 = vstv %s345
        %v546 = vmul.f32 %v545, %v522
        %v547 = vmul.f32 %v545, %v523
        %v548 = vadd.f32 %v543, %v546
        %v549 = vadd.f32 %v544, %v547
        %v550 = vmul.f32 %v535, 0.13333334
        %v551 = vmul.f32 %v536, 0.13333334
        %v552 = vsub.f32 %v550, 1.0
        %v553 = vsub.f32 %v551, 1.0
        %v554 = vmul.f32 %v548, 0.13333334
        %v555 = vmul.f32 %v549, 0.13333334
        %v556 = vsub.f32 %v554, 1.0
        %v557 = vsub.f32 %v555, 1.0
        %v558 = vand.u32 2147483647, %v552
        %v559 = vand.u32 2147483647, %v553
        %vm560 = vcmp.lt.f32.partialorder %v558, 1.0
        %vm561 = vcmp.lt.f32.partialorder %v559, 1.0
        %v562 = vand.u32 2147483647, %v556
        %v563 = vand.u32 2147483647, %v557
        %vm564 = vcmp.lt.f32.partialorder %v562, 1.0
        %vm565 = vcmp.lt.f32.partialorder %v563, 1.0
        %vm566 = vmand %vm560, %vm564
        %vm567 = vmand %vm561, %vm565
        %v568 = vsel %vm566, 1, 0
        %v569 = vsel %vm567, 1, 0
        %v570 = vcvt.s32.f32 %v568
        %v571 = vcvt.s32.f32 %v569
        %v574 = vrot.slane %v571, 7
        %v575 = vsel %vm500, %v570, %v574
        %577 = vst.msk [vmem:[%s291] sm:$0x3] %vm506, %v575
        %v578 = vmul.f32 %v552, 8.0
        %v579 = vmul.f32 %v553, 8.0
        %v580 = vadd.f32 %v578, 7.5
        %v581 = vadd.f32 %v579, 7.5
        %v582 = vmax.f32 %v580, 0.0
        %v583 = vmax.f32 %v581, 0.0
        %v584 = vmin.f32 %v582, 15.0
        %v585 = vmin.f32 %v583, 15.0
        %v586 = vmul.f32 %v556, 8.0
        %v587 = vmul.f32 %v557, 8.0
        %v588 = vadd.f32 %v586, 7.5
        %v589 = vadd.f32 %v587, 7.5
        %v590 = vmax.f32 %v588, 0.0
        %v591 = vmax.f32 %v589, 0.0
        %v592 = vmin.f32 %v590, 15.0
        %v593 = vmin.f32 %v591, 15.0
        %v594 = vfloor.f32 %v584
        %v595 = vfloor.f32 %v585
        %v596 = vfloor.f32 %v592
        %v597 = vfloor.f32 %v593
        %v598 = vsub.f32 %v584, %v594
        %v599 = vsub.f32 %v585, %v595
        %v600 = vsub.f32 %v592, %v596
        %v601 = vsub.f32 %v593, %v597
        %v602 = vadd.f32 %v594, 1.0
        %v603 = vadd.f32 %v595, 1.0
        %v604 = vmin.f32 %v602, 15.0
        %v605 = vmin.f32 %v603, 15.0
        %v606 = vadd.f32 %v596, 1.0
        %v607 = vadd.f32 %v597, 1.0
        %v608 = vmin.f32 %v606, 15.0
        %v609 = vmin.f32 %v607, 15.0
        %v610 = vsub.f32 1.0, %v598
        %v611 = vsub.f32 1.0, %v599
        %v612 = vsub.f32 1.0, %v600
        %v613 = vsub.f32 1.0, %v601
        %v614 = vlaneseq
        %v615 = vshrl.u32 %v614, 7
        %v616 = vadd.s32 %v615, 8
        %v617 = vcvt.s32.f32 %v615
        %v618 = vcvt.s32.f32 %v616
        %v619 = vperm.slane %v594, 0
        %v620 = vperm.slane %v595, 0
        %vm621 = vcmp.eq.f32.partialorder %v617, %v619
        %vm622 = vcmp.eq.f32.partialorder %v617, %v620
        %vm623 = vcmp.eq.f32.partialorder %v618, %v619
        %vm624 = vcmp.eq.f32.partialorder %v618, %v620
        %v625 = vperm.slane %v610, 0
        %v626 = vperm.slane %v611, 0
        %v627 = vsel %vm621, %v625, 0.0
        %v628 = vsel %vm622, %v626, 0.0
        %v629 = vsel %vm623, %v625, 0.0
        %v630 = vsel %vm624, %v626, 0.0
        %v631 = vperm.slane %v604, 0
        %v632 = vperm.slane %v605, 0
        %vm633 = vcmp.eq.f32.partialorder %v617, %v631
        %vm634 = vcmp.eq.f32.partialorder %v617, %v632
        %vm635 = vcmp.eq.f32.partialorder %v618, %v631
        %vm636 = vcmp.eq.f32.partialorder %v618, %v632
        %v637 = vperm.slane %v598, 0
        %v638 = vperm.slane %v599, 0
        %v639 = vsel %vm633, %v637, 0.0
        %v640 = vsel %vm634, %v638, 0.0
        %v641 = vsel %vm635, %v637, 0.0
        %v642 = vsel %vm636, %v638, 0.0
        %v643 = vadd.f32 %v627, %v639
        %v644 = vadd.f32 %v628, %v640
        %v645 = vadd.f32 %v629, %v641
        %v646 = vadd.f32 %v630, %v642
        %v647 = vpack.c.bf16 %v645, %v643
        %v648 = vpack.c.bf16 %v646, %v644
        %v649 = vld [vmem:[%s305] sm:$0xf]
        %v650 = vld [vmem:[%s305 + $0x4] sm:$0xf]
        %v651 = vld [vmem:[%s305 + $0x8] sm:$0xf]
        %v652 = vld [vmem:[%s305 + $0xc] sm:$0xf]
        %v653 = vld [vmem:[%s305 + $0x10] sm:$0xf]
        %v654 = vld [vmem:[%s305 + $0x14] sm:$0xf]
        %v655 = vld [vmem:[%s305 + $0x18] sm:$0xf]
        %v656 = vld [vmem:[%s305 + $0x1c] sm:$0xf]
        %v665 = vunpack.c.l.b16 %v649
        %v666 = vunpack.c.l.b16 %v650
        %v667 = vunpack.c.l.b16 %v651
        %v668 = vunpack.c.l.b16 %v652
        %v669 = vunpack.c.l.b16 %v653
        %v670 = vunpack.c.l.b16 %v654
        %v671 = vunpack.c.l.b16 %v655
        %v672 = vunpack.c.l.b16 %v656
        %v673 = vpack.c.b16 %v666, %v665
        %v674 = vpack.c.b16 %v668, %v667
        %v675 = vpack.c.b16 %v670, %v669
        %v676 = vpack.c.b16 %v672, %v671
        %vm677 = vcmask 130048
        %v679 = vsel %vm677, %v673, 0
        %v682 = vsel %vm677, %v674, 0
        %v685 = vsel %vm677, %v675, 0
        %v688 = vsel %vm677, %v676, 0
        %690 = vmatpush.bf16.msra.mxu0 0
        %691 = vmatpush.bf16.msra.mxu0 0
        %692 = vmatpush.bf16.msra.mxu0 0
        %693 = vmatpush.bf16.msra.mxu0 0
        %694 = vmatpush.bf16.msra.mxu0 0
        %695 = vmatpush.bf16.msra.mxu0 0
        %696 = vmatpush.bf16.msra.mxu0 0
        %697 = vmatpush.bf16.msra.mxu0 %v647
        %698 = vmatmul.bf16.gmra.mxu0 %v679
        %v699 = vpop.f32.mrf.mxu0
        %v700 = vadd.f32 0.0, %v699
        %v701 = vpop.f32.mrf.mxu0
        %v702 = vadd.f32 0.0, %v701
        %703 = vmatmul.bf16.gmra.mxu0 %v682
        %v704 = vpop.f32.mrf.mxu0
        %v705 = vadd.f32 0.0, %v704
        %v706 = vpop.f32.mrf.mxu0
        %v707 = vadd.f32 0.0, %v706
        %708 = vmatmul.bf16.gmra.mxu0 %v685
        %v709 = vpop.f32.mrf.mxu0
        %v710 = vadd.f32 0.0, %v709
        %v711 = vpop.f32.mrf.mxu0
        %v712 = vadd.f32 0.0, %v711
        %713 = vmatmul.bf16.gmra.mxu0 %v688
        %v714 = vpop.f32.mrf.mxu0
        %v715 = vadd.f32 0.0, %v714
        %v716 = vpop.f32.mrf.mxu0
        %v717 = vadd.f32 0.0, %v716
        %718 = vdwg.mxu0
        %719 = vmatpush.bf16.msra.mxu0 0
        %720 = vmatpush.bf16.msra.mxu0 0
        %721 = vmatpush.bf16.msra.mxu0 0
        %722 = vmatpush.bf16.msra.mxu0 0
        %723 = vmatpush.bf16.msra.mxu0 0
        %724 = vmatpush.bf16.msra.mxu0 0
        %725 = vmatpush.bf16.msra.mxu0 0
        %726 = vmatpush.bf16.msra.mxu0 %v648
        %727 = vmatmul.bf16.gmra.mxu0 %v679
        %v728 = vpop.f32.mrf.mxu0
        %v729 = vadd.f32 0.0, %v728
        %v730 = vpop.f32.mrf.mxu0
        %v731 = vadd.f32 0.0, %v730
        %732 = vmatmul.bf16.gmra.mxu0 %v682
        %v733 = vpop.f32.mrf.mxu0
        %v734 = vadd.f32 0.0, %v733
        %v735 = vpop.f32.mrf.mxu0
        %v736 = vadd.f32 0.0, %v735
        %737 = vmatmul.bf16.gmra.mxu0 %v685
        %v738 = vpop.f32.mrf.mxu0
        %v739 = vadd.f32 0.0, %v738
        %v740 = vpop.f32.mrf.mxu0
        %v741 = vadd.f32 0.0, %v740
        %742 = vmatmul.bf16.gmra.mxu0 %v688
        %v743 = vpop.f32.mrf.mxu0
        %v744 = vadd.f32 0.0, %v743
        %v745 = vpop.f32.mrf.mxu0
        %v746 = vadd.f32 0.0, %v745
        %747 = vdwg.mxu0
        %v748 = vadd.f32 %v617, 0.0
        %v749 = vadd.f32 %v618, 0.0
        %v750 = vperm.slane %v596, 0
        %v751 = vperm.slane %v597, 0
        %vm752 = vcmp.eq.f32.partialorder %v748, %v750
        %vm753 = vcmp.eq.f32.partialorder %v748, %v751
        %vm754 = vcmp.eq.f32.partialorder %v749, %v750
        %vm755 = vcmp.eq.f32.partialorder %v749, %v751
        %v756 = vperm.slane %v612, 0
        %v757 = vperm.slane %v613, 0
        %v758 = vsel %vm752, %v756, 0.0
        %v759 = vsel %vm753, %v757, 0.0
        %v760 = vsel %vm754, %v756, 0.0
        %v761 = vsel %vm755, %v757, 0.0
        %v762 = vperm.slane %v608, 0
        %v763 = vperm.slane %v609, 0
        %vm764 = vcmp.eq.f32.partialorder %v748, %v762
        %vm765 = vcmp.eq.f32.partialorder %v748, %v763
        %vm766 = vcmp.eq.f32.partialorder %v749, %v762
        %vm767 = vcmp.eq.f32.partialorder %v749, %v763
        %v768 = vperm.slane %v600, 0
        %v769 = vperm.slane %v601, 0
        %v770 = vsel %vm764, %v768, 0.0
        %v771 = vsel %vm765, %v769, 0.0
        %v772 = vsel %vm766, %v768, 0.0
        %v773 = vsel %vm767, %v769, 0.0
        %v774 = vadd.f32 %v758, %v770
        %v775 = vadd.f32 %v759, %v771
        %v776 = vadd.f32 %v760, %v772
        %v777 = vadd.f32 %v761, %v773
        %v778 = vmul.f32 %v700, %v774
        %v779 = vmul.f32 %v729, %v775
        %v780 = vmul.f32 %v702, %v776
        %v781 = vmul.f32 %v731, %v777
        %v782 = vadd.f32 %v778, %v780
        %v783 = vrot.slane %v782, 4
        %v784 = vadd.f32 %v782, %v783
        %v785 = vrot.slane %v784, 2
        %v786 = vadd.f32 %v784, %v785
        %v787 = vrot.slane %v786, 1
        %v788 = vadd.f32 %v786, %v787
        %v789 = vadd.f32 %v779, %v781
        %v790 = vrot.slane %v789, 4
        %v791 = vadd.f32 %v789, %v790
        %v792 = vrot.slane %v791, 2
        %v793 = vadd.f32 %v791, %v792
        %v794 = vrot.slane %v793, 1
        %v795 = vadd.f32 %v793, %v794
        %v796 = vadd.f32 %v788, 0.0
        %v797 = vadd.f32 %v795, 0.0
        %v798 = vmul.f32 %v705, %v774
        %v799 = vmul.f32 %v734, %v775
        %v800 = vmul.f32 %v707, %v776
        %v801 = vmul.f32 %v736, %v777
        %v802 = vadd.f32 %v798, %v800
        %v803 = vrot.slane %v802, 4
        %v804 = vadd.f32 %v802, %v803
        %v805 = vrot.slane %v804, 2
        %v806 = vadd.f32 %v804, %v805
        %v807 = vrot.slane %v806, 1
        %v808 = vadd.f32 %v806, %v807
        %v809 = vadd.f32 %v799, %v801
        %v810 = vrot.slane %v809, 4
        %v811 = vadd.f32 %v809, %v810
        %v812 = vrot.slane %v811, 2
        %v813 = vadd.f32 %v811, %v812
        %v814 = vrot.slane %v813, 1
        %v815 = vadd.f32 %v813, %v814
        %v816 = vadd.f32 %v808, 0.0
        %v817 = vadd.f32 %v815, 0.0
        %v818 = vmul.f32 %v710, %v774
        %v819 = vmul.f32 %v739, %v775
        %v820 = vmul.f32 %v712, %v776
        %v821 = vmul.f32 %v741, %v777
        %v822 = vadd.f32 %v818, %v820
        %v823 = vrot.slane %v822, 4
        %v824 = vadd.f32 %v822, %v823
        %v825 = vrot.slane %v824, 2
        %v826 = vadd.f32 %v824, %v825
        %v827 = vrot.slane %v826, 1
        %v828 = vadd.f32 %v826, %v827
        %v829 = vadd.f32 %v819, %v821
        %v830 = vrot.slane %v829, 4
        %v831 = vadd.f32 %v829, %v830
        %v832 = vrot.slane %v831, 2
        %v833 = vadd.f32 %v831, %v832
        %v834 = vrot.slane %v833, 1
        %v835 = vadd.f32 %v833, %v834
        %v836 = vadd.f32 %v828, 0.0
        %v837 = vadd.f32 %v835, 0.0
        %v838 = vmul.f32 %v715, %v774
        %v839 = vmul.f32 %v744, %v775
        %v840 = vmul.f32 %v717, %v776
        %v841 = vmul.f32 %v746, %v777
        %v842 = vadd.f32 %v838, %v840
        %v843 = vrot.slane %v842, 4
        %v844 = vadd.f32 %v842, %v843
        %v845 = vrot.slane %v844, 2
        %v846 = vadd.f32 %v844, %v845
        %v847 = vrot.slane %v846, 1
        %v848 = vadd.f32 %v846, %v847
        %v849 = vadd.f32 %v839, %v841
        %v850 = vrot.slane %v849, 4
        %v851 = vadd.f32 %v849, %v850
        %v852 = vrot.slane %v851, 2
        %v853 = vadd.f32 %v851, %v852
        %v854 = vrot.slane %v853, 1
        %v855 = vadd.f32 %v853, %v854
        %v856 = vadd.f32 %v848, 0.0
        %v857 = vadd.f32 %v855, 0.0
        %v860 = vrot.slane %v797, 7
        %v861 = vsel %vm500, %v796, %v860
        %863 = vst.msk [vmem:[%s277] ss:$4 sm:$0x3] %vm506, %v861
        %v866 = vrot.slane %v817, 7
        %v867 = vsel %vm500, %v816, %v866
        %s869 = scalar_lea.vmem %s277, 1 [#allocation5]
        %870 = vst.msk [vmem:[%s869] ss:$4 sm:$0x3] %vm506, %v867
        %v873 = vrot.slane %v837, 7
        %v874 = vsel %vm500, %v836, %v873
        %s876 = scalar_lea.vmem %s277, 2 [#allocation5]
        %877 = vst.msk [vmem:[%s876] ss:$4 sm:$0x3] %vm506, %v874
        %v880 = vrot.slane %v857, 7
        %v881 = vsel %vm500, %v856, %v880
        %s883 = scalar_lea.vmem %s277, 3 [#allocation5]
        %884 = vst.msk [vmem:[%s883] ss:$4 sm:$0x3] %vm506, %v881
        %s885 = sand.u32 %s121, 1
        %s886 = scalar_lea.sflag [#allocation3], %s885
        %s887 = sand.u32 %s121, 1
        %s888 = smul.addr %s887, 8
        %s889 = scalar_lea.vmem [#allocation5], %s888
        %s890 = sand.u32 %s24, 1
        %s891 = scalar_lea.sflag [#allocation7], %s890
        %s892 = sand.u32 %s149, 1
        %s893 = smul.addr %s892, 2
        %s894 = scalar_lea.vmem [#allocation6], %s893
        %s895 = sand.u32 %s24, 1
        %s896 = scalar_lea.sflag [#allocation7], %s895
        %s897 = sand.u32 %s177, 1
        %s898 = smul.addr %s897, 2
        %s899 = scalar_lea.vmem [#allocation8], %s898
        // Predicated region
        $region37: #{tpu_custom_call.1} parent=31 // pred_check
          %p900 = pneg %p131
        $region38: #{tpu_custom_call.1} parent=31 // pred_check_branch
          %902 = sbr.rel (%p900) target = $region40
        $region39: #{tpu_custom_call.1} parent=31 // pred_region
          %s903 = smul.u32 2, %s29
          %905 = vsyncadd %s886, 0
          %s906 = smul.addr %s28, 2
          %s907 = sadd.s32 %s903, %s906
          %s908 = smul.addr %s907, 4
          %s909 = scalar_lea.hbm %s3, %s908
          %s911 = sshll.u32 %s889, 4
          %s912 = int_to_ptr.vmem [resolvable:$true] %s911
          %s913 = sshll.u32 %s909, 4
          %s914 = int_to_ptr.hbm [resolvable:$true] %s913
          %916 = dma.vmem_to_hbm [thread:$0]  %s912, 128, %s914, %s886
        $region40: #{tpu_custom_call.1} parent=31 // pred_fallthru
          _
        // Predicated region
        $region41: #{tpu_custom_call.1} parent=31 // pred_check
          %p917 = pneg %p159
        $region42: #{tpu_custom_call.1} parent=31 // pred_check_branch
          %919 = sbr.rel (%p917) target = $region44
        $region43: #{tpu_custom_call.1} parent=31 // pred_region
          %s920 = smul.u32 2, %s29
          %922 = vsyncadd %s891, 0
          %s923 = smul.addr %s28, 2
          %s924 = sadd.s32 %s920, %s923
          %s925 = scalar_lea.hbm %s4, %s924
          %s927 = sshll.u32 %s894, 4
          %s928 = int_to_ptr.vmem [resolvable:$true] %s927
          %s929 = sshll.u32 %s925, 4
          %s930 = int_to_ptr.hbm [resolvable:$true] %s929
          %932 = dma.vmem_to_hbm [thread:$0]  %s928, 32, %s930, %s891
        $region44: #{tpu_custom_call.1} parent=31 // pred_fallthru
          _
        // Predicated region
        $region45: #{tpu_custom_call.1} parent=31 // pred_check
          %p933 = pneg %p187
        $region46: #{tpu_custom_call.1} parent=31 // pred_check_branch
          %935 = sbr.rel (%p933) target = $region48
        $region47: #{tpu_custom_call.1} parent=31 // pred_region
          %s936 = smul.u32 2, %s29
          %938 = vsyncadd %s896, 0
          %s939 = smul.addr %s28, 2
          %s940 = sadd.s32 %s936, %s939
          %s941 = scalar_lea.hbm %s5, %s940
          %s943 = sshll.u32 %s899, 4
          %s944 = int_to_ptr.vmem [resolvable:$true] %s943
          %s945 = sshll.u32 %s941, 4
          %s946 = int_to_ptr.hbm [resolvable:$true] %s945
          %948 = dma.vmem_to_hbm [thread:$0]  %s944, 32, %s946, %s896
        $region48: #{tpu_custom_call.1} parent=31 // pred_fallthru
          _
      $region32: #{tpu_custom_call.1} parent=5 // pred_fallthru
        _
      %p949 = scmp.le.s32.totalorder 2, %s19
      // Predicated region
      $region49: #{tpu_custom_call.1} parent=5 // pred_check
        %p950 = pneg %p949
      $region50: #{tpu_custom_call.1} parent=5 // pred_check_branch
        %952 = sbr.rel (%p950) target = $region52
      $region51: #{tpu_custom_call.1} parent=5 // pred_region
        %s953 = ssub.s32 %s19, 2
        // Predicated region
        $region53: #{tpu_custom_call.1} parent=51 // pred_check
          %p954 = pneg %p137
        $region54: #{tpu_custom_call.1} parent=51 // pred_check_branch
          %956 = sbr.rel (%p954) target = $region56
        $region55: #{tpu_custom_call.1} parent=51 // pred_region
          %s957 = sand.u32 %s122, 1
          %s958 = scalar_lea.sflag [#allocation3], %s957
          %s959 = sand.u32 %s122, 1
          %s960 = smul.addr %s959, 8
          %s961 = scalar_lea.vmem [#allocation5], %s960
          %963 = dma.done %s958, 128
        $region56: #{tpu_custom_call.1} parent=51 // pred_fallthru
          _
        // Predicated region
        $region57: #{tpu_custom_call.1} parent=51 // pred_check
          %p964 = pneg %p165
        $region58: #{tpu_custom_call.1} parent=51 // pred_check_branch
          %966 = sbr.rel (%p964) target = $region60
        $region59: #{tpu_custom_call.1} parent=51 // pred_region
          %s967 = sand.u32 %s25, 1
          %s968 = scalar_lea.sflag [#allocation7], %s967
          %s969 = sand.u32 %s150, 1
          %s970 = smul.addr %s969, 2
          %s971 = scalar_lea.vmem [#allocation6], %s970
          %973 = dma.done %s968, 32
        $region60: #{tpu_custom_call.1} parent=51 // pred_fallthru
          _
        // Predicated region
        $region61: #{tpu_custom_call.1} parent=51 // pred_check
          %p974 = pneg %p193
        $region62: #{tpu_custom_call.1} parent=51 // pred_check_branch
          %976 = sbr.rel (%p974) target = $region64
        $region63: #{tpu_custom_call.1} parent=51 // pred_region
          %s977 = sand.u32 %s25, 1
          %s978 = scalar_lea.sflag [#allocation7], %s977
          %s979 = sand.u32 %s178, 1
          %s980 = smul.addr %s979, 2
          %s981 = scalar_lea.vmem [#allocation8], %s980
          %983 = dma.done %s978, 32
        $region64: #{tpu_custom_call.1} parent=51 // pred_fallthru
          _
      $region52: #{tpu_custom_call.1} parent=5 // pred_fallthru
        _
    $region6: #{tpu_custom_call.1} parent=1 // loop_footer
      %s23 = sadd.s32 1, %s19
    $region7: #{tpu_custom_call.1} parent=1 // loop_footer_branch
      %18 = sbr.rel target = $region3
    $region8: #{tpu_custom_call.1} parent=1 // loop_exit
      _
    %984 = vsyncpa [#allocation3], 1
    %s985 = scalar_lea.sflag [#allocation3], 1
    %986 = vsyncpa %s985, 1
    %987 = vsyncpa [#allocation7], 1
    %s988 = scalar_lea.sflag [#allocation7], 1
    %989 = vsyncpa %s988, 1
    %990 = vsyncpa [#allocation4], 1
    %s991 = scalar_lea.sflag [#allocation4], 1
    %992 = vsyncpa %s991, 1

</llo_original>
